<compile_context>
chip_gen: v7x
topology: tpu7x:2x2x1
jax: 0.10.0
libtpu: 0.0.40
codegen_flags: <defaults>
</compile_context>

<pallas_src>
import functools

import jax
import jax.numpy as jnp
from jax.experimental import pallas as pl
from jax.experimental.pallas import tpu as pltpu


_VMEM_LIMIT = 32 * 1024 * 1024   # explicit scoped-VMEM budget, safe on v5e/v6e/v7x


def _pick_tile(dim, target, align):
    """Largest tile <= target that divides dim and is a multiple of `align`.
    Falls back to the full dim (always layout-legal for the (8,128) rule)."""
    if dim <= target:
        return dim
    t = (target // align) * align
    while t >= align:
        if dim % t == 0:
            return t
        t -= align
    return dim


# ---------------------------------------------------------------------------
# Tiled linear kernel (bf16 MXU operands, f32 accumulation) -- qkv projection
# ---------------------------------------------------------------------------

def _matmul_kernel(x_ref, w_ref, o_ref, acc_ref):
    @pl.when(pl.program_id(2) == 0)
    def _init():
        acc_ref[...] = jnp.zeros_like(acc_ref)

    acc_ref[...] += jnp.dot(x_ref[...], w_ref[...],
                            preferred_element_type=jnp.float32)

    @pl.when(pl.program_id(2) == pl.num_programs(2) - 1)
    def _store():
        o_ref[...] = acc_ref[...].astype(o_ref.dtype)


def pallas_linear(x, w, *, out_dtype=jnp.float32, tm=256, tn=256, tk=512):
    """y = x @ w.  x: (M, K), w: (K, N)."""
    M, K = x.shape
    Kw, N = w.shape
    assert K == Kw
    tm = _pick_tile(M, tm, 8)
    tn = _pick_tile(N, tn, 128)
    tk = _pick_tile(K, tk, 128)
    grid = (M // tm, N // tn, K // tk)

    return pl.pallas_call(
        _matmul_kernel,
        out_shape=jax.ShapeDtypeStruct((M, N), out_dtype),
        grid=grid,
        in_specs=[pl.BlockSpec((tm, tk), lambda i, j, k: (i, k)),
                  pl.BlockSpec((tk, tn), lambda i, j, k: (k, j))],
        out_specs=pl.BlockSpec((tm, tn), lambda i, j, k: (i, j)),
        scratch_shapes=[pltpu.VMEM((tm, tn), jnp.float32)],
        compiler_params=pltpu.CompilerParams(
            dimension_semantics=("parallel", "parallel", "arbitrary"),
            vmem_limit_bytes=_VMEM_LIMIT),
    )(x, w)


# ---------------------------------------------------------------------------
# Fused attention + output-projection kernel
#   grid = (batch, query-tile); all heads handled per step.
# ---------------------------------------------------------------------------

def _attn_proj_kernel(q_ref, k_ref, v_ref, wp_ref, bp_ref, o_ref):
    # q_ref: (1, H, tq, D); k_ref/v_ref: (1, H, N, D)
    # wp_ref: (H, D, C);    bp_ref: (1, C);   o_ref: (1, tq, C)
    # Softmax scale is already folded into the q-projection weights.
    q = q_ref[0]                                            # (H, tq, D) bf16
    k = k_ref[0]                                            # (H, N,  D) bf16
    v = v_ref[0]                                            # (H, N,  D) bf16

    s = jnp.einsum("hqd,hkd->hqk", q, k,
                   preferred_element_type=jnp.float32)      # (H, tq, N) f32
    s = s - jnp.max(s, axis=-1, keepdims=True)
    p = jnp.exp(s)
    denom = jnp.sum(p, axis=-1, keepdims=True)
    p = p * pl.reciprocal(denom, approx=True)               # EUP slot, ~free

    o = jnp.einsum("hqk,hkd->hqd", p.astype(v.dtype), v,
                   preferred_element_type=jnp.float32)      # (H, tq, D) f32

    # Fused output projection: out[q, c] = sum_h o[h, q, :] @ Wp[h, :, c]
    wp = wp_ref[...]                                        # (H, D, C) bf16
    oc = jnp.einsum("hqd,hdc->hqc", o.astype(wp.dtype), wp,
                    preferred_element_type=jnp.float32)     # (H, tq, C) f32
    out = jnp.sum(oc, axis=0) + bp_ref[...]                 # (tq, C) f32
    o_ref[0] = out.astype(o_ref.dtype)


def pallas_attention_proj(q, k, v, wp_hdc, b_proj, *,
                          out_dtype=jnp.float32, tq_target=256):
    """q, k, v: (B, H, N, D); wp_hdc: (H, D, C); b_proj: (1, C) -> (B, N, C)."""
    B, H, N, D = q.shape
    C = H * D
    tq = _pick_tile(N, tq_target, 8)
    grid = (B, N // tq)

    q_spec = pl.BlockSpec((1, H, tq, D), lambda b, qi: (b, 0, qi, 0))
    kv_spec = pl.BlockSpec((1, H, N, D), lambda b, qi: (b, 0, 0, 0))
    wp_spec = pl.BlockSpec((H, D, C), lambda b, qi: (0, 0, 0))
    bp_spec = pl.BlockSpec((1, C), lambda b, qi: (0, 0))
    o_spec = pl.BlockSpec((1, tq, C), lambda b, qi: (b, qi, 0))

    return pl.pallas_call(
        _attn_proj_kernel,
        out_shape=jax.ShapeDtypeStruct((B, N, C), out_dtype),
        grid=grid,
        in_specs=[q_spec, kv_spec, kv_spec, wp_spec, bp_spec],
        out_specs=o_spec,
        compiler_params=pltpu.CompilerParams(
            dimension_semantics=("parallel", "parallel"),
            vmem_limit_bytes=_VMEM_LIMIT),
    )(q, k, v, wp_hdc, b_proj)


# ---------------------------------------------------------------------------
# Parameter prep + forward pass
# ---------------------------------------------------------------------------

def init_params(key, dim):
    """Synthetic params mirroring nn.Linear shapes (weight: (out, in))."""
    k1, k2, k3 = jax.random.split(key, 3)
    w_qkv = jax.random.normal(k1, (3 * dim, dim), jnp.float32) * 0.02
    b_qkv = jnp.zeros((3 * dim,), jnp.float32)       # qkv_bias=False -> zero
    w_proj = jax.random.normal(k2, (dim, dim), jnp.float32) * 0.02
    b_proj = jax.random.normal(k3, (dim,), jnp.float32) * 0.02
    return {"w_qkv": w_qkv, "b_qkv": b_qkv, "w_proj": w_proj, "b_proj": b_proj}


def prepare_params(params, dim, num_heads, compute_dtype=jnp.bfloat16):
    """One-time prep: fold the softmax scale into the q projection,
    pre-transpose / reshape weights, cast MXU operands to bf16."""
    head_dim = dim // num_heads
    scale = head_dim ** (-0.5)
    # torch layout: w_qkv is (3C, C); rows [0:C) are the q projection.
    w_qkv = params["w_qkv"].at[:dim, :].multiply(scale)
    # qkv_bias=False in the reference module -> bias is identically zero, skipped.
    # proj weight (C, C): out = o_flat @ W.T with o_flat columns ordered (H, D)
    # head-major, so W.T reshaped to (H, D, C) matches the fused contraction.
    wp_hdc = params["w_proj"].T.reshape(num_heads, head_dim, dim)
    return {
        "w_qkv_t": jnp.asarray(w_qkv.T, compute_dtype),          # (C, 3C)
        "wp_hdc": jnp.asarray(wp_hdc, compute_dtype),            # (H, D, C)
        "b_proj": params["b_proj"].reshape(1, dim).astype(jnp.float32),
    }


def attention_forward(x, prepped, num_heads):
    """Matches Attention.forward (with_qkv=True, qkv_bias=False, drop=0.0)."""
    B, N, C = x.shape
    H = num_heads
    D = C // H
    cdt = prepped["w_qkv_t"].dtype

    # qkv projection: (B*N, C) @ (C, 3C), bf16 out
    x2 = x.reshape(B * N, C).astype(cdt)
    qkv = pallas_linear(x2, prepped["w_qkv_t"], out_dtype=cdt)     # (B*N, 3C)

    # qkv split to (3, B, H, N, D).  Remaining XLA-side shuffle (bf16).
    qkv = qkv.reshape(B, N, 3, H, D).transpose(2, 0, 3, 1, 4)
    q, k, v = qkv[0], qkv[1], qkv[2]

    # fused attention + output projection -> (B, N, C) f32
    return pallas_attention_proj(q, k, v, prepped["wp_hdc"], prepped["b_proj"],
                                 out_dtype=jnp.float32)


# ---------------------------------------------------------------------------
# Pure-JAX f32 reference (PyTorch semantics) for sanity checking
# ---------------------------------------------------------------------------

def reference_forward(x, params, num_heads):
    B, N, C = x.shape
    H = num_heads
    D = C // H
    scale = D ** (-0.5)
    qkv = x @ params["w_qkv"].T + params["b_qkv"]
    qkv = qkv.reshape(B, N, 3, H, D).transpose(2, 0, 3, 1, 4)
    q, k, v = qkv[0], qkv[1], qkv[2]
    attn = jnp.einsum("bhnd,bhmd->bhnm", q, k) * scale
    attn = jax.nn.softmax(attn, axis=-1)
    o = jnp.einsum("bhnm,bhmd->bhnd", attn, v)
    o = o.transpose(0, 2, 1, 3).reshape(B, N, C)
    return o @ params["w_proj"].T + params["b_proj"]


if __name__ == "__main__":
    B, N, C, H = 2, 8, 32, 8   # batch=2, seq=8, dim=32, num_heads=8 (head_dim=4)

    key = jax.random.PRNGKey(0)
    kx, kp = jax.random.split(key)
    x = jax.random.normal(kx, (B, N, C), jnp.float32)
    params = init_params(kp, C)
    prepped = prepare_params(params, C, H)

    fwd = jax.jit(functools.partial(attention_forward, num_heads=H))
    out = fwd(x, prepped)
    out = jax.block_until_ready(out)

    ref = reference_forward(x, params, num_heads=H)
    assert out.shape == (B, N, C)
    # bf16 MXU operands + approx reciprocal -> relaxed tolerance vs f32 reference.
    assert jnp.allclose(out, ref, atol=2e-2, rtol=2e-2), "mismatch vs reference"

    print("KERNEL_OK")
</pallas_src>

<mosaic_0001>
module attributes {stable_mosaic.version = 11 : i64} {
  func.func @_matmul_kernel(%arg0: i32, %arg1: i32, %arg2: i32, %arg3: memref<16x32xbf16, #tpu.memory_space<vmem>>, %arg4: memref<32x96xbf16, #tpu.memory_space<vmem>>, %arg5: memref<16x96xbf16, #tpu.memory_space<vmem>>, %arg6: memref<16x96xf32, #tpu.memory_space<vmem>>) attributes {dimension_semantics = [#tpu.dimension_semantics<parallel>, #tpu.dimension_semantics<parallel>, #tpu.dimension_semantics<arbitrary>], iteration_bounds = array<i64: 1, 1, 1>, scalar_prefetch = 0 : i64, scratch_operands = 1 : i64, tpu.core_type = #tpu.core_type<tc>, window_params = [{transform_indices = @transform_0, window_bounds = array<i64: 16, 32>}, {transform_indices = @transform_1, window_bounds = array<i64: 32, 96>}, {transform_indices = @transform_2, window_bounds = array<i64: 16, 96>}]} {
    %c0_i32 = arith.constant 0 : i32
    %0 = arith.cmpi eq, %arg2, %c0_i32 : i32
    %1 = arith.extui %0 : i1 to i32
    %c0_i32_0 = arith.constant 0 : i32
    %2 = arith.cmpi ne, %1, %c0_i32_0 : i32
    scf.if %2 {
      %cst_10 = arith.constant 0.000000e+00 : f32
      %12 = vector.broadcast %cst_10 : f32 to vector<16x96xf32>
      %c0_11 = arith.constant 0 : index
      %c0_12 = arith.constant 0 : index
      %13 = vector.load %arg6[%c0_11, %c0_12] : memref<16x96xf32, #tpu.memory_space<vmem>>, vector<16x96xf32>
      tpu.vector_store %arg6[%c0_11, %c0_12], %12 {strides = array<i32>} : memref<16x96xf32, #tpu.memory_space<vmem>>, vector<16x96xf32>,
    } else {
    }
    %c0 = arith.constant 0 : index
    %c0_1 = arith.constant 0 : index
    %3 = vector.load %arg6[%c0, %c0_1] : memref<16x96xf32, #tpu.memory_space<vmem>>, vector<16x96xf32>
    %c0_2 = arith.constant 0 : index
    %c0_3 = arith.constant 0 : index
    %4 = vector.load %arg3[%c0_2, %c0_3] : memref<16x32xbf16, #tpu.memory_space<vmem>>, vector<16x32xbf16>
    %c0_4 = arith.constant 0 : index
    %c0_5 = arith.constant 0 : index
    %5 = vector.load %arg4[%c0_4, %c0_5] : memref<32x96xbf16, #tpu.memory_space<vmem>>, vector<32x96xbf16>
    %cst = arith.constant dense<0.000000e+00> : vector<16x96xf32>
    %6 = tpu.matmul %4, %5, %cst {dimension_numbers = #tpu.dot_dimension_numbers<[1], [0], [0], [1], [0, 0, 1, 1], [], []>} : vector<16x32xbf16>, vector<32x96xbf16>, vector<16x96xf32> -> vector<16x96xf32>
    %7 = arith.addf %3, %6 : vector<16x96xf32>
    %c0_6 = arith.constant 0 : index
    %c0_7 = arith.constant 0 : index
    %8 = vector.load %arg6[%c0_6, %c0_7] : memref<16x96xf32, #tpu.memory_space<vmem>>, vector<16x96xf32>
    tpu.vector_store %arg6[%c0_6, %c0_7], %7 {strides = array<i32>} : memref<16x96xf32, #tpu.memory_space<vmem>>, vector<16x96xf32>,
    %c0_i32_8 = arith.constant 0 : i32
    %9 = arith.cmpi eq, %arg2, %c0_i32_8 : i32
    %10 = arith.extui %9 : i1 to i32
    %c0_i32_9 = arith.constant 0 : i32
    %11 = arith.cmpi ne, %10, %c0_i32_9 : i32
    scf.if %11 {
      %c0_10 = arith.constant 0 : index
      %c0_11 = arith.constant 0 : index
      %12 = vector.load %arg6[%c0_10, %c0_11] : memref<16x96xf32, #tpu.memory_space<vmem>>, vector<16x96xf32>
      %13 = arith.truncf %12 : vector<16x96xf32> to vector<16x96xbf16>
      %c0_12 = arith.constant 0 : index
      %c0_13 = arith.constant 0 : index
      %14 = vector.load %arg5[%c0_12, %c0_13] : memref<16x96xbf16, #tpu.memory_space<vmem>>, vector<16x96xbf16>
      tpu.vector_store %arg5[%c0_12, %c0_13], %13 {strides = array<i32>} : memref<16x96xbf16, #tpu.memory_space<vmem>>, vector<16x96xbf16>,
    } else {
    }
    return
  }
  func.func @transform_0(%arg0: i32, %arg1: i32, %arg2: i32) -> (i32, i32) {
    %c0_i32 = arith.constant 0 : i32
    return %arg0, %arg2 : i32, i32
  }
  func.func @transform_1(%arg0: i32, %arg1: i32, %arg2: i32) -> (i32, i32) {
    %c0_i32 = arith.constant 0 : i32
    return %arg2, %arg1 : i32, i32
  }
  func.func @transform_2(%arg0: i32, %arg1: i32, %arg2: i32) -> (i32, i32) {
    %c0_i32 = arith.constant 0 : i32
    return %arg0, %arg1 : i32, i32
  }
}

module attributes {stable_mosaic.version = 11 : i64} {
  func.func @_attn_proj_kernel(%arg0: i32, %arg1: i32, %arg2: memref<1x8x8x4xbf16, #tpu.memory_space<vmem>>, %arg3: memref<1x8x8x4xbf16, #tpu.memory_space<vmem>>, %arg4: memref<1x8x8x4xbf16, #tpu.memory_space<vmem>>, %arg5: memref<8x4x32xbf16, #tpu.memory_space<vmem>>, %arg6: memref<1x32xf32, #tpu.memory_space<vmem>>, %arg7: memref<1x8x32xf32, #tpu.memory_space<vmem>>) attributes {dimension_semantics = [#tpu.dimension_semantics<parallel>, #tpu.dimension_semantics<parallel>], iteration_bounds = array<i64: 2, 1>, scalar_prefetch = 0 : i64, scratch_operands = 0 : i64, tpu.core_type = #tpu.core_type<tc>, window_params = [{transform_indices = @transform_0, window_bounds = array<i64: 1, 8, 8, 4>}, {transform_indices = @transform_1, window_bounds = array<i64: 1, 8, 8, 4>}, {transform_indices = @transform_2, window_bounds = array<i64: 1, 8, 8, 4>}, {pipeline_mode = #tpu.pipeline_mode<synchronous>, transform_indices = @transform_3, window_bounds = array<i64: 8, 4, 32>}, {pipeline_mode = #tpu.pipeline_mode<synchronous>, transform_indices = @transform_4, window_bounds = array<i64: 1, 32>}, {transform_indices = @transform_5, window_bounds = array<i64: 1, 8, 32>}]} {
    %c0 = arith.constant 0 : index
    %c0_0 = arith.constant 0 : index
    %c0_1 = arith.constant 0 : index
    %c0_2 = arith.constant 0 : index
    %0 = vector.load %arg2[%c0, %c0_0, %c0_1, %c0_2] : memref<1x8x8x4xbf16, #tpu.memory_space<vmem>>, vector<1x8x8x4xbf16>
    %1 = vector.shape_cast %0 : vector<1x8x8x4xbf16> to vector<8x8x4xbf16>
    %c0_3 = arith.constant 0 : index
    %c0_4 = arith.constant 0 : index
    %c0_5 = arith.constant 0 : index
    %c0_6 = arith.constant 0 : index
    %2 = vector.load %arg3[%c0_3, %c0_4, %c0_5, %c0_6] : memref<1x8x8x4xbf16, #tpu.memory_space<vmem>>, vector<1x8x8x4xbf16>
    %3 = vector.shape_cast %2 : vector<1x8x8x4xbf16> to vector<8x8x4xbf16>
    %c0_7 = arith.constant 0 : index
    %c0_8 = arith.constant 0 : index
    %c0_9 = arith.constant 0 : index
    %c0_10 = arith.constant 0 : index
    %4 = vector.load %arg4[%c0_7, %c0_8, %c0_9, %c0_10] : memref<1x8x8x4xbf16, #tpu.memory_space<vmem>>, vector<1x8x8x4xbf16>
    %5 = vector.shape_cast %4 : vector<1x8x8x4xbf16> to vector<8x8x4xbf16>
    "tpu.trace_start"() <{level = 10 : i32, message = "hqd,hkd->hqk"}> : () -> ()
    %cst = arith.constant dense<0.000000e+00> : vector<8x8x8xf32>
    %6 = tpu.matmul %1, %3, %cst {dimension_numbers = #tpu.dot_dimension_numbers<[2], [2], [1], [1], [0, 0, 0, 1, 1, 1], [0], [0]>} : vector<8x8x4xbf16>, vector<8x8x4xbf16>, vector<8x8x8xf32> -> vector<8x8x8xf32>
    "tpu.trace_stop"() : () -> ()
    %cst_11 = arith.constant dense<0xFF800000> : vector<8x8xf32>
    %7 = vector.multi_reduction <maximumf>, %6, %cst_11 [2] : vector<8x8x8xf32> to vector<8x8xf32>
    %8 = vector.shape_cast %7 : vector<8x8xf32> to vector<8x8x1xf32>
    %9 = vector.broadcast %8 : vector<8x8x1xf32> to vector<8x8x8xf32>
    %10 = arith.subf %6, %9 : vector<8x8x8xf32>
    %11 = math.exp %10 : vector<8x8x8xf32>
    %cst_12 = arith.constant dense<0.000000e+00> : vector<8x8xf32>
    %12 = vector.multi_reduction <add>, %11, %cst_12 [2] : vector<8x8x8xf32> to vector<8x8xf32>
    %13 = vector.shape_cast %12 : vector<8x8xf32> to vector<8x8x1xf32>
    %14 = tpu.reciprocal %13 {approx = true} : vector<8x8x1xf32> -> vector<8x8x1xf32>
    %15 = vector.broadcast %14 : vector<8x8x1xf32> to vector<8x8x8xf32>
    %16 = arith.mulf %11, %15 : vector<8x8x8xf32>
    %17 = arith.truncf %16 : vector<8x8x8xf32> to vector<8x8x8xbf16>
    "tpu.trace_start"() <{level = 10 : i32, message = "hqk,hkd->hqd"}> : () -> ()
    %cst_13 = arith.constant dense<0.000000e+00> : vector<8x8x4xf32>
    %18 = tpu.matmul %17, %5, %cst_13 {dimension_numbers = #tpu.dot_dimension_numbers<[2], [1], [1], [2], [0, 0, 0, 1, 1, 2], [0], [0]>} : vector<8x8x8xbf16>, vector<8x8x4xbf16>, vector<8x8x4xf32> -> vector<8x8x4xf32>
    "tpu.trace_stop"() : () -> ()
    %c0_14 = arith.constant 0 : index
    %c0_15 = arith.constant 0 : index
    %c0_16 = arith.constant 0 : index
    %19 = vector.load %arg5[%c0_14, %c0_15, %c0_16] : memref<8x4x32xbf16, #tpu.memory_space<vmem>>, vector<8x4x32xbf16>
    %20 = arith.truncf %18 : vector<8x8x4xf32> to vector<8x8x4xbf16>
    "tpu.trace_start"() <{level = 10 : i32, message = "hqd,hdc->hqc"}> : () -> ()
    %cst_17 = arith.constant dense<0.000000e+00> : vector<8x8x32xf32>
    %21 = tpu.matmul %20, %19, %cst_17 {dimension_numbers = #tpu.dot_dimension_numbers<[2], [1], [1], [2], [0, 0, 0, 1, 1, 2], [0], [0]>} : vector<8x8x4xbf16>, vector<8x4x32xbf16>, vector<8x8x32xf32> -> vector<8x8x32xf32>
    "tpu.trace_stop"() : () -> ()
    %cst_18 = arith.constant dense<0.000000e+00> : vector<8x32xf32>
    %22 = vector.multi_reduction <add>, %21, %cst_18 [0] : vector<8x8x32xf32> to vector<8x32xf32>
    %c0_19 = arith.constant 0 : index
    %c0_20 = arith.constant 0 : index
    %23 = vector.load %arg6[%c0_19, %c0_20] : memref<1x32xf32, #tpu.memory_space<vmem>>, vector<1x32xf32>
    %24 = vector.broadcast %23 : vector<1x32xf32> to vector<8x32xf32>
    %25 = arith.addf %22, %24 : vector<8x32xf32>
    %c0_21 = arith.constant 0 : index
    %c0_22 = arith.constant 0 : index
    %c0_23 = arith.constant 0 : index
    %26 = vector.load %arg7[%c0_21, %c0_22, %c0_23] : memref<1x8x32xf32, #tpu.memory_space<vmem>>, vector<1x8x32xf32>
    %27 = vector.shape_cast %26 : vector<1x8x32xf32> to vector<8x32xf32>
    %28 = vector.shape_cast %25 : vector<8x32xf32> to vector<1x8x32xf32>
    tpu.vector_store %arg7[%c0_21, %c0_22, %c0_23], %28 {strides = array<i32>} : memref<1x8x32xf32, #tpu.memory_space<vmem>>, vector<1x8x32xf32>,
    return
  }
  func.func @transform_0(%arg0: i32, %arg1: i32) -> (i32, i32, i32, i32) {
    %c0_i32 = arith.constant 0 : i32
    %c0_i32_0 = arith.constant 0 : i32
    %c0_i32_1 = arith.constant 0 : i32
    return %arg0, %c0_i32, %arg1, %c0_i32_0 : i32, i32, i32, i32
  }
  func.func @transform_1(%arg0: i32, %arg1: i32) -> (i32, i32, i32, i32) {
    %c0_i32 = arith.constant 0 : i32
    %c0_i32_0 = arith.constant 0 : i32
    %c0_i32_1 = arith.constant 0 : i32
    %c0_i32_2 = arith.constant 0 : i32
    return %arg0, %c0_i32, %c0_i32_0, %c0_i32_1 : i32, i32, i32, i32
  }
  func.func @transform_2(%arg0: i32, %arg1: i32) -> (i32, i32, i32, i32) {
    %c0_i32 = arith.constant 0 : i32
    %c0_i32_0 = arith.constant 0 : i32
    %c0_i32_1 = arith.constant 0 : i32
    %c0_i32_2 = arith.constant 0 : i32
    return %arg0, %c0_i32, %c0_i32_0, %c0_i32_1 : i32, i32, i32, i32
  }
  func.func @transform_3(%arg0: i32, %arg1: i32) -> (i32, i32, i32) {
    %c0_i32 = arith.constant 0 : i32
    %c0_i32_0 = arith.constant 0 : i32
    %c0_i32_1 = arith.constant 0 : i32
    %c0_i32_2 = arith.constant 0 : i32
    return %c0_i32, %c0_i32_0, %c0_i32_1 : i32, i32, i32
  }
  func.func @transform_4(%arg0: i32, %arg1: i32) -> (i32, i32) {
    %c0_i32 = arith.constant 0 : i32
    %c0_i32_0 = arith.constant 0 : i32
    %c0_i32_1 = arith.constant 0 : i32
    return %c0_i32, %c0_i32_0 : i32, i32
  }
  func.func @transform_5(%arg0: i32, %arg1: i32) -> (i32, i32, i32) {
    %c0_i32 = arith.constant 0 : i32
    %c0_i32_0 = arith.constant 0 : i32
    return %arg0, %arg1, %c0_i32 : i32, i32, i32
  }
}

</mosaic_0001>

<llo_original>
// kernel: attention_forward.2
$region0: #{attention_forward.2}
  #allocation0 [shape = 'u32[]', space=smem, size = 0x4, offset = 0x4, fixed_abs, tag = 'smem constant byte address 0x4 - core index']
  #allocation1 [shape = 'u32[144,128]{1,0:T(1,128)}', space=vmem, size = 0x12000, scoped, tag = 'internal scratch']
  #allocation2 [shape = 'f32[16,96]{1,0:T(8,128)}', space=vmem, size = 0x2000, scoped, tag = 'scratch operand']
  %s0 = inlined_call_operand.vmem [shape: bf16[16,32], index: 0, kind: input, shape index: {}]
  %s1 = inlined_call_operand.vmem [shape: bf16[32,96], index: 1, kind: input, shape index: {}]
  %s2 = inlined_call_operand.vmem [shape: bf16[16,96], index: 2, kind: output, shape index: {}]
  %s3 = sld [smem:[#allocation0]]
  $region26: #{attention_forward.2} parent=0
    _
  %s5 = ssub.s32 1, %s3
  %s6 = scalar_select 0, %s5, %s3
  // Predicated region
  $region2: #{attention_forward.2} parent=0 // pred_check
    _
  $region3: #{attention_forward.2} parent=0 // pred_check_branch
    %8 = sbr.rel (0) target = $region5
  $region4: #{attention_forward.2} parent=0 // pred_region
    _
  $region5: #{attention_forward.2} parent=0 // pred_fallthru
    _
  // Predicated region
  $region6: #{attention_forward.2} parent=0 // pred_check
    _
  $region7: #{attention_forward.2} parent=0 // pred_check_branch
    %10 = sbr.rel (0) target = $region9
  $region8: #{attention_forward.2} parent=0 // pred_region
    _
  $region9: #{attention_forward.2} parent=0 // pred_fallthru
    _
  %p12 = scmp.eq.s32.totalorder 0, 0
  // Predicated region
  $region10: #{attention_forward.2} parent=0 // pred_check
    %p13 = pneg %p12
  $region11: #{attention_forward.2} parent=0 // pred_check_branch
    %15 = sbr.rel (%p13) target = $region13
  $region12: #{attention_forward.2} parent=0 // pred_region
    %vm16 = vcmask 785408
    %17 = vst.msk [vmem:[#allocation2] sm:$0xff] %vm16, 0.0
    %18 = vst.msk [vmem:[#allocation2 + $0x8] sm:$0xff] %vm16, 0.0
  $region13: #{attention_forward.2} parent=0 // pred_fallthru
    _
  %v19 = vld [vmem:[#allocation2] sm:$0xff]
  %v20 = vld [vmem:[#allocation2 + $0x8] sm:$0xff]
  %v21 = vld [vmem:[%s0] sm:$0xf]
  %v22 = vld [vmem:[%s0 + $0x4] sm:$0xf]
  %v23 = vld [vmem:[%s1] sm:$0xf]
  %v24 = vld [vmem:[%s1 + $0x4] sm:$0xf]
  %v25 = vld [vmem:[%s1 + $0x8] sm:$0xf]
  %v26 = vld [vmem:[%s1 + $0xc] sm:$0xf]
  %v29 = vunpack.c.l.b16 %v21
  %v30 = vunpack.c.l.b16 %v22
  %v31 = vpack.c.b16 %v30, %v29
  %v36 = vunpack.c.l.b16 %v23
  %v37 = vunpack.c.l.b16 %v24
  %v38 = vunpack.c.l.b16 %v25
  %v39 = vunpack.c.l.b16 %v26
  %v40 = vpack.c.b16 %v37, %v36
  %v41 = vpack.c.b16 %v39, %v38
  %vm44 = vcmask 261120
  %v46 = vsel %vm44, %v31, 0
  %48 = vmatprep.subr.bf16.mxu0 0
  %49 = vmatpush1.bf16.msra.mxu0 %v40
  %50 = vmatprep.subr.bf16.mxu0 0
  %51 = vmatpush1.bf16.msra.mxu0 %v41
  %52 = vmatprep.subr.bf16.mxu0 0
  %53 = vmatpush1.bf16.msra.mxu0 0
  %54 = vmatprep.subr.bf16.mxu0 0
  %55 = vmatpush1.bf16.msra.mxu0 0
  %56 = vmatprep.subr.bf16.mxu0 0
  %57 = vmatpush1.bf16.msra.mxu0 0
  %58 = vmatprep.subr.bf16.mxu0 0
  %59 = vmatpush1.bf16.msra.mxu0 0
  %60 = vmatprep.subr.bf16.mxu0 0
  %61 = vmatpush1.bf16.msra.mxu0 0
  %62 = vmatprep.subr.bf16.mxu0 0
  %63 = vmatpush1.bf16.msra.mxu0 0
  %64 = vmatprep.subr.bf16.mxu0 0
  %65 = vmatpush1.bf16.msra.mxu0 0
  %66 = vmatprep.subr.bf16.mxu0 0
  %67 = vmatpush1.bf16.msra.mxu0 0
  %68 = vmatprep.subr.bf16.mxu0 0
  %69 = vmatpush1.bf16.msra.mxu0 0
  %70 = vmatprep.subr.bf16.mxu0 0
  %71 = vmatpush1.bf16.msra.mxu0 0
  %72 = vmatprep.subr.bf16.mxu0 0
  %73 = vmatpush1.bf16.msra.mxu0 0
  %74 = vmatprep.subr.bf16.mxu0 0
  %75 = vmatpush1.bf16.msra.mxu0 0
  %76 = vmatprep.subr.bf16.mxu0 0
  %77 = vmatpush1.bf16.msra.mxu0 0
  %78 = vmatprep.subr.bf16.mxu0 0
  %79 = vmatpush1.bf16.msra.mxu0 0
  %80 = vmatprep.mubr.bf16.mxu0 0
  %81 = vmatmul.mubr.bf16.gmra.mrb[0].mxu0 %v46
  %v82 = vpop.f32.mrb[0].mxu0
  %v83 = vadd.f32 0.0, %v82
  %v84 = vpop.f32.mrb[0].mxu0
  %v85 = vpop.f32.mrb[0].mxu0
  %v86 = vadd.f32 0.0, %v85
  %v87 = vpop.f32.mrb[0].mxu0
  %88 = vdwg.mxu0
  %v89 = vadd.f32 %v19, %v83
  %v90 = vadd.f32 %v20, %v86
  %vm91 = vcmask 785408
  %92 = vst.msk [vmem:[#allocation2] sm:$0xff] %vm91, %v89
  %93 = vst.msk [vmem:[#allocation2 + $0x8] sm:$0xff] %vm91, %v90
  // Predicated region
  $region14: #{attention_forward.2} parent=0 // pred_check
    %p94 = pneg %p12
  $region15: #{attention_forward.2} parent=0 // pred_check_branch
    %96 = sbr.rel (%p94) target = $region17
  $region16: #{attention_forward.2} parent=0 // pred_region
    %v97 = vld [vmem:[#allocation2] sm:$0xff]
    %v98 = vld [vmem:[#allocation2 + $0x8] sm:$0xff]
    %v99 = vpack.c.bf16 %v98, %v97
    %v101 = vunpack.c.l.b16 %v99
    %v102 = vunpack.c.h.b16 %v99
    %v103 = vpack.c.b16 %v101, %v101
    %v104 = vpack.c.b16 %v102, %v102
    %vm107 = vcmask 781312
    %108 = vst.msk [vmem:[%s2] sm:$0xf] %vm107, %v103
    %109 = vst.msk [vmem:[%s2 + $0x4] sm:$0xf] %vm107, %v104
  $region17: #{attention_forward.2} parent=0 // pred_fallthru
    _
  // Predicated region
  $region18: #{attention_forward.2} parent=0 // pred_check
    _
  $region19: #{attention_forward.2} parent=0 // pred_check_branch
    %111 = sbr.rel (0) target = $region21
  $region20: #{attention_forward.2} parent=0 // pred_region
    _
  $region21: #{attention_forward.2} parent=0 // pred_fallthru
    _
  // Predicated region
  $region22: #{attention_forward.2} parent=0 // pred_check
    _
  $region23: #{attention_forward.2} parent=0 // pred_check_branch
    %113 = sbr.rel (0) target = $region25
  $region24: #{attention_forward.2} parent=0 // pred_region
    _
  $region25: #{attention_forward.2} parent=0 // pred_fallthru
    _

// kernel: attention_forward.3
$region0: #{attention_forward.3}
  #allocation0 [shape = 'u32[]', space=smem, size = 0x4, offset = 0x4, fixed_abs, tag = 'smem constant byte address 0x4 - core index']
  #allocation1 [shape = 'u32[144,128]{1,0:T(1,128)}', space=vmem, size = 0x12000, scoped, tag = 'internal scratch']
  %s0 = inlined_call_operand.vmem [shape: bf16[2,8,8,4], index: 0, kind: input, shape index: {}]
  %s1 = inlined_call_operand.vmem [shape: bf16[2,8,8,4], index: 1, kind: input, shape index: {}]
  %s2 = inlined_call_operand.vmem [shape: bf16[2,8,8,4], index: 2, kind: input, shape index: {}]
  %s3 = inlined_call_operand.vmem [shape: bf16[8,4,32], index: 3, kind: input, shape index: {}]
  %s4 = inlined_call_operand.vmem [shape: f32[1,32], index: 4, kind: input, shape index: {}]
  %s5 = inlined_call_operand.hbm [shape: f32[2,8,32], index: 5, kind: output, shape index: {}]
  %s6 = sld [smem:[#allocation0]]
  $region53: #{attention_forward.3} parent=0
    _
  %s8 = ssub.s32 1, %s6
  %s9 = scalar_select 0, %s8, %s6
  $region1: #{attention_forward.3} parent=0
    #allocation2 [shape = 'u8[8192]{0}', space=vmem, size = 0x2000, scoped, tag = 'output window, operand 0']
    #allocation3 [shape = 's32[2]{0}', space=sflag, size = 0x8, scoped, tag = 'scoped memory for attention_forward.3']
    %10 = vsyncpa [#allocation3], 0
    %s11 = scalar_lea.sflag [#allocation3], 1
    %12 = vsyncpa %s11, 0
    loop: start=0, step=1, limit=4
    $region2: #{attention_forward.3} parent=1 // loop_pre_header
      _
    $region3: #{attention_forward.3} parent=1 // loop_header
      %s14 = sphi 0, %s18
      %p15 = scmp.ge.s32.totalorder %s14, 4
      %s21 = sphi 0, %s33
      %s22 = sphi 0, %s29
      %s23 = sphi 0, %s21
      %s24 = sphi 0, %s22
      %s25 = sphi 0, %s23
      %s26 = sphi 0, %s24
      %s38 = sphi 0, %s40
      %s41 = sphi 0, %s38
      %s42 = sphi 0, %s41
      %s58 = sphi 0, %s42
      %s64 = sphi 0, %s66
      %s67 = sphi 0, %s64
      %s68 = sphi 0, %s67
      %s84 = sphi 0, %s68
      %s90 = sphi 0, %s92
      %s93 = sphi 0, %s90
      %s94 = sphi 0, %s93
      %s110 = sphi 0, %s94
      %s114 = sphi 0, %s114
      %s116 = sphi 0, %s114
      %s117 = sphi 0, %s116
      %s131 = sphi 0, %s117
      %s135 = sphi 0, %s135
      %s137 = sphi 0, %s135
      %s138 = sphi 0, %s137
      %s152 = sphi 0, %s138
      %s160 = sphi 0, %s162
      %s163 = sphi 0, %s160
      %s164 = sphi 0, %s163
      %s180 = sphi 0, %s164
    $region4: #{attention_forward.3} parent=1 // loop_header_branch
      %17 = sbr.rel (%p15) target = $region8
    $region5: #{attention_forward.3} parent=1 // loop_body
      %s19 = ssub.s32 %s14, 1
      %s20 = ssub.s32 %s14, 2
      %s27 = sadd.s32 1, %s22
      %p28 = scmp.ge.s32.totalorder %s27, 1
      %s29 = scalar_select %p28, 0, %s27
      %s30 = sadd.s32 1, %s21
      %s31 = scalar_select %p28, %s30, %s21
      %p32 = scmp.ge.s32.totalorder %s31, 2
      %s33 = scalar_select %p32, 0, %s31
      %s34 = ssub.s32 %s21, %s33
      %s35 = ssub.s32 %s22, %s29
      %s36 = sor.u32 %s34, %s35
      %p37 = scmp.eq.s32.totalorder %s36, 0
      %s39 = sadd.s32 %s38, 1
      %s40 = scalar_select %p37, %s38, %s39
      %p43 = pneg %p37
      %p44 = scmp.eq.s32.totalorder %s14, 1
      %p45 = por %p43, %p44
      %p46 = scmp.ne.s32.totalorder %s38, %s41
      %p47 = scmp.eq.s32.totalorder %s14, 0
      %p48 = por %p46, %p47
      %p49 = scmp.ne.s32.totalorder %s38, %s41
      %p50 = scmp.eq.s32.totalorder %s19, 1
      %p51 = por %p49, %p50
      %p52 = scmp.ne.s32.totalorder %s41, %s42
      %p53 = scmp.eq.s32.totalorder %s19, 0
      %p54 = por %p52, %p53
      %p55 = scmp.ne.s32.totalorder %s41, %s42
      %p56 = scmp.eq.s32.totalorder %s20, 1
      %p57 = por %p55, %p56
      %p59 = scmp.ne.s32.totalorder %s42, %s58
      %p60 = scmp.eq.s32.totalorder %s20, 0
      %p61 = por %p59, %p60
      %s62 = ssub.s32 %s21, %s33
      %p63 = scmp.eq.s32.totalorder %s62, 0
      %s65 = sadd.s32 %s64, 1
      %s66 = scalar_select %p63, %s64, %s65
      %p69 = pneg %p63
      %p70 = scmp.eq.s32.totalorder %s14, 1
      %p71 = por %p69, %p70
      %p72 = scmp.ne.s32.totalorder %s64, %s67
      %p73 = scmp.eq.s32.totalorder %s14, 0
      %p74 = por %p72, %p73
      %p75 = scmp.ne.s32.totalorder %s64, %s67
      %p76 = scmp.eq.s32.totalorder %s19, 1
      %p77 = por %p75, %p76
      %p78 = scmp.ne.s32.totalorder %s67, %s68
      %p79 = scmp.eq.s32.totalorder %s19, 0
      %p80 = por %p78, %p79
      %p81 = scmp.ne.s32.totalorder %s67, %s68
      %p82 = scmp.eq.s32.totalorder %s20, 1
      %p83 = por %p81, %p82
      %p85 = scmp.ne.s32.totalorder %s68, %s84
      %p86 = scmp.eq.s32.totalorder %s20, 0
      %p87 = por %p85, %p86
      %s88 = ssub.s32 %s21, %s33
      %p89 = scmp.eq.s32.totalorder %s88, 0
      %s91 = sadd.s32 %s90, 1
      %s92 = scalar_select %p89, %s90, %s91
      %p95 = pneg %p89
      %p96 = scmp.eq.s32.totalorder %s14, 1
      %p97 = por %p95, %p96
      %p98 = scmp.ne.s32.totalorder %s90, %s93
      %p99 = scmp.eq.s32.totalorder %s14, 0
      %p100 = por %p98, %p99
      %p101 = scmp.ne.s32.totalorder %s90, %s93
      %p102 = scmp.eq.s32.totalorder %s19, 1
      %p103 = por %p101, %p102
      %p104 = scmp.ne.s32.totalorder %s93, %s94
      %p105 = scmp.eq.s32.totalorder %s19, 0
      %p106 = por %p104, %p105
      %p107 = scmp.ne.s32.totalorder %s93, %s94
      %p108 = scmp.eq.s32.totalorder %s20, 1
      %p109 = por %p107, %p108
      %p111 = scmp.ne.s32.totalorder %s94, %s110
      %p112 = scmp.eq.s32.totalorder %s20, 0
      %p113 = por %p111, %p112
      %s115 = sadd.s32 %s114, 1
      %p118 = scmp.eq.s32.totalorder %s14, 1
      %p119 = scmp.ne.s32.totalorder %s114, %s116
      %p120 = scmp.eq.s32.totalorder %s14, 0
      %p121 = por %p119, %p120
      %p122 = scmp.ne.s32.totalorder %s114, %s116
      %p123 = scmp.eq.s32.totalorder %s19, 1
      %p124 = por %p122, %p123
      %p125 = scmp.ne.s32.totalorder %s116, %s117
      %p126 = scmp.eq.s32.totalorder %s19, 0
      %p127 = por %p125, %p126
      %p128 = scmp.ne.s32.totalorder %s116, %s117
      %p129 = scmp.eq.s32.totalorder %s20, 1
      %p130 = por %p128, %p129
      %p132 = scmp.ne.s32.totalorder %s117, %s131
      %p133 = scmp.eq.s32.totalorder %s20, 0
      %p134 = por %p132, %p133
      %s136 = sadd.s32 %s135, 1
      %p139 = scmp.eq.s32.totalorder %s14, 1
      %p140 = scmp.ne.s32.totalorder %s135, %s137
      %p141 = scmp.eq.s32.totalorder %s14, 0
      %p142 = por %p140, %p141
      %p143 = scmp.ne.s32.totalorder %s135, %s137
      %p144 = scmp.eq.s32.totalorder %s19, 1
      %p145 = por %p143, %p144
      %p146 = scmp.ne.s32.totalorder %s137, %s138
      %p147 = scmp.eq.s32.totalorder %s19, 0
      %p148 = por %p146, %p147
      %p149 = scmp.ne.s32.totalorder %s137, %s138
      %p150 = scmp.eq.s32.totalorder %s20, 1
      %p151 = por %p149, %p150
      %p153 = scmp.ne.s32.totalorder %s138, %s152
      %p154 = scmp.eq.s32.totalorder %s20, 0
      %p155 = por %p153, %p154
      %s156 = ssub.s32 %s21, %s33
      %s157 = ssub.s32 %s22, %s29
      %s158 = sor.u32 %s156, %s157
      %p159 = scmp.eq.s32.totalorder %s158, 0
      %s161 = sadd.s32 %s160, 1
      %s162 = scalar_select %p159, %s160, %s161
      %p165 = pneg %p159
      %p166 = scmp.eq.s32.totalorder %s14, 1
      %p167 = por %p165, %p166
      %p168 = scmp.ne.s32.totalorder %s160, %s163
      %p169 = scmp.eq.s32.totalorder %s14, 0
      %p170 = por %p168, %p169
      %p171 = scmp.ne.s32.totalorder %s160, %s163
      %p172 = scmp.eq.s32.totalorder %s19, 1
      %p173 = por %p171, %p172
      %p174 = scmp.ne.s32.totalorder %s163, %s164
      %p175 = scmp.eq.s32.totalorder %s19, 0
      %p176 = por %p174, %p175
      %p177 = scmp.ne.s32.totalorder %s163, %s164
      %p178 = scmp.eq.s32.totalorder %s20, 1
      %p179 = por %p177, %p178
      %p181 = scmp.ne.s32.totalorder %s164, %s180
      %p182 = scmp.eq.s32.totalorder %s20, 0
      %p183 = por %p181, %p182
      %p184 = scmp.le.s32.totalorder 1, %s14
      %p185 = scmp.lt.s32.totalorder %s14, 3
      %p186 = pnand %p184, %p185
      %p187 = pneg %p186
      // Predicated region
      $region9: #{attention_forward.3} parent=5 // pred_check
        _
      $region10: #{attention_forward.3} parent=5 // pred_check_branch
        %189 = sbr.rel (%p186) target = $region12
      $region11: #{attention_forward.3} parent=5 // pred_region
        %s190 = ssub.s32 %s14, 1
        // Predicated region
        $region13: #{attention_forward.3} parent=11 // pred_check
          %p191 = pneg %p127
        $region14: #{attention_forward.3} parent=11 // pred_check_branch
          %193 = sbr.rel (%p191) target = $region16
        $region15: #{attention_forward.3} parent=11 // pred_region
          _
        $region16: #{attention_forward.3} parent=11 // pred_fallthru
          _
        // Predicated region
        $region17: #{attention_forward.3} parent=11 // pred_check
          %p194 = pneg %p148
        $region18: #{attention_forward.3} parent=11 // pred_check_branch
          %196 = sbr.rel (%p194) target = $region20
        $region19: #{attention_forward.3} parent=11 // pred_region
          _
        $region20: #{attention_forward.3} parent=11 // pred_fallthru
          _
      $region12: #{attention_forward.3} parent=5 // pred_fallthru
        _
      %p197 = scmp.lt.s32.totalorder %s14, 2
      // Predicated region
      $region21: #{attention_forward.3} parent=5 // pred_check
        %p198 = pneg %p197
      $region22: #{attention_forward.3} parent=5 // pred_check_branch
        %200 = sbr.rel (%p198) target = $region24
      $region23: #{attention_forward.3} parent=5 // pred_region
        // Predicated region
        $region25: #{attention_forward.3} parent=23 // pred_check
          %p201 = pneg %p48
        $region26: #{attention_forward.3} parent=23 // pred_check_branch
          %203 = sbr.rel (%p201) target = $region28
        $region27: #{attention_forward.3} parent=23 // pred_region
          %p204 = scmp.lt.s32.totalorder %s21, 1
          %s205 = scalar_select %p204, %s21, 1
          %p206 = scmp.lt.s32.totalorder %s22, 0
          %s207 = scalar_select %p206, %s22, 0
          %s208 = smul.addr %s205, 8
          %s209 = sadd.s32 %s207, %s208
          %s210 = smul.addr %s209, 4
          %s211 = scalar_lea.vmem %s0, %s210
        $region28: #{attention_forward.3} parent=23 // pred_fallthru
          _
        // Predicated region
        $region29: #{attention_forward.3} parent=23 // pred_check
          %p212 = pneg %p74
        $region30: #{attention_forward.3} parent=23 // pred_check_branch
          %214 = sbr.rel (%p212) target = $region32
        $region31: #{attention_forward.3} parent=23 // pred_region
          %p215 = scmp.lt.s32.totalorder %s21, 1
          %s216 = scalar_select %p215, %s21, 1
          %s217 = smul.addr %s216, 8
          %s218 = smul.addr %s217, 4
          %s219 = scalar_lea.vmem %s1, %s218
        $region32: #{attention_forward.3} parent=23 // pred_fallthru
          _
        // Predicated region
        $region33: #{attention_forward.3} parent=23 // pred_check
          %p220 = pneg %p100
        $region34: #{attention_forward.3} parent=23 // pred_check_branch
          %222 = sbr.rel (%p220) target = $region36
        $region35: #{attention_forward.3} parent=23 // pred_region
          %p223 = scmp.lt.s32.totalorder %s21, 1
          %s224 = scalar_select %p223, %s21, 1
          %s225 = smul.addr %s224, 8
          %s226 = smul.addr %s225, 4
          %s227 = scalar_lea.vmem %s2, %s226
        $region36: #{attention_forward.3} parent=23 // pred_fallthru
          _
      $region24: #{attention_forward.3} parent=5 // pred_fallthru
        _
      %p228 = scmp.le.s32.totalorder 1, %s14
      %p229 = scmp.lt.s32.totalorder %s14, 3
      %p230 = pnand %p228, %p229
      %p231 = pneg %p230
      // Predicated region
      $region37: #{attention_forward.3} parent=5 // pred_check
        _
      $region38: #{attention_forward.3} parent=5 // pred_check_branch
        %233 = sbr.rel (%p230) target = $region40
      $region39: #{attention_forward.3} parent=5 // pred_region
        %s234 = ssub.s32 %s14, 1
        %p235 = scmp.lt.s32.totalorder %s23, 1
        %s236 = scalar_select %p235, %s23, 1
        %p237 = scmp.lt.s32.totalorder %s24, 0
        %s238 = scalar_select %p237, %s24, 0
        %s239 = smul.addr %s236, 8
        %s240 = sadd.s32 %s238, %s239
        %s241 = smul.addr %s240, 4
        %s242 = scalar_lea.vmem %s0, %s241
        %p243 = pneg %p54
        %p244 = pneg %p51
        %p245 = scmp.lt.s32.totalorder %s23, 1
        %s246 = scalar_select %p245, %s23, 1
        %s247 = smul.addr %s246, 8
        %s248 = smul.addr %s247, 4
        %s249 = scalar_lea.vmem %s1, %s248
        %p250 = pneg %p80
        %p251 = pneg %p77
        %p252 = scmp.lt.s32.totalorder %s23, 1
        %s253 = scalar_select %p252, %s23, 1
        %s254 = smul.addr %s253, 8
        %s255 = smul.addr %s254, 4
        %s256 = scalar_lea.vmem %s2, %s255
        %p257 = pneg %p106
        %p258 = pneg %p103
        %p259 = pneg %p127
        %p260 = pneg %p124
        %p261 = pneg %p148
        %p262 = pneg %p145
        %p263 = pneg %p176
        %p264 = pneg %p173
        %s265 = sand.u32 %s163, 1
        %s266 = scalar_lea.sflag [#allocation3], %s265
        %s267 = sand.u32 %s163, 1
        %s268 = smul.addr %s267, 8
        %s269 = scalar_lea.vmem [#allocation2], %s268
        %p270 = scmp.lt.s32.totalorder %s23, 1
        %s271 = scalar_select %p270, %s23, 1
        %p272 = scmp.lt.s32.totalorder %s24, 0
        %s273 = scalar_select %p272, %s24, 0
        %s274 = smul.addr %s271, 8
        %s275 = sadd.s32 %s273, %s274
        %s276 = smul.addr %s275, 4
        %s277 = scalar_lea.vmem %s0, %s276
        %p278 = scmp.lt.s32.totalorder %s23, 1
        %s279 = scalar_select %p278, %s23, 1
        %s280 = smul.addr %s279, 8
        %s281 = smul.addr %s280, 4
        %s282 = scalar_lea.vmem %s1, %s281
        %p283 = scmp.lt.s32.totalorder %s23, 1
        %s284 = scalar_select %p283, %s23, 1
        %s285 = smul.addr %s284, 8
        %s286 = smul.addr %s285, 4
        %s287 = scalar_lea.vmem %s2, %s286
        %v289 = vld [vmem:[%s277] sm:$0xf]
        %v290 = vld [vmem:[%s277 + $0x4] sm:$0xf]
        %v291 = vld [vmem:[%s277 + $0x8] sm:$0xf]
        %v292 = vld [vmem:[%s277 + $0xc] sm:$0xf]
        %v293 = vld [vmem:[%s277 + $0x10] sm:$0xf]
        %v294 = vld [vmem:[%s277 + $0x14] sm:$0xf]
        %v295 = vld [vmem:[%s277 + $0x18] sm:$0xf]
        %v296 = vld [vmem:[%s277 + $0x1c] sm:$0xf]
        %v297 = vld [vmem:[%s282] sm:$0xf]
        %v298 = vld [vmem:[%s282 + $0x4] sm:$0xf]
        %v299 = vld [vmem:[%s282 + $0x8] sm:$0xf]
        %v300 = vld [vmem:[%s282 + $0xc] sm:$0xf]
        %v301 = vld [vmem:[%s282 + $0x10] sm:$0xf]
        %v302 = vld [vmem:[%s282 + $0x14] sm:$0xf]
        %v303 = vld [vmem:[%s282 + $0x18] sm:$0xf]
        %v304 = vld [vmem:[%s282 + $0x1c] sm:$0xf]
        %v305 = vld [vmem:[%s287] sm:$0xf]
        %v306 = vld [vmem:[%s287 + $0x4] sm:$0xf]
        %v307 = vld [vmem:[%s287 + $0x8] sm:$0xf]
        %v308 = vld [vmem:[%s287 + $0xc] sm:$0xf]
        %v309 = vld [vmem:[%s287 + $0x10] sm:$0xf]
        %v310 = vld [vmem:[%s287 + $0x14] sm:$0xf]
        %v311 = vld [vmem:[%s287 + $0x18] sm:$0xf]
        %v312 = vld [vmem:[%s287 + $0x1c] sm:$0xf]
        %vm313 = vcmask 31744
        %v315 = vsel %vm313, %v289, 0
        %v318 = vsel %vm313, %v297, 0
        %320 = vmatprep.subr.bf16.mxu0 0
        %321 = vmatpush1.bf16.xpose.msra.mxu0 %v318
        %322 = vmatprep.subr.bf16.mxu0 0
        %323 = vmatpush1.bf16.xpose.msra.mxu0 0
        %324 = vmatprep.subr.bf16.mxu0 0
        %325 = vmatpush1.bf16.xpose.msra.mxu0 0
        %326 = vmatprep.subr.bf16.mxu0 0
        %327 = vmatpush1.bf16.xpose.msra.mxu0 0
        %328 = vmatprep.subr.bf16.mxu0 0
        %329 = vmatpush1.bf16.xpose.msra.mxu0 0
        %330 = vmatprep.subr.bf16.mxu0 0
        %331 = vmatpush1.bf16.xpose.msra.mxu0 0
        %332 = vmatprep.subr.bf16.mxu0 0
        %333 = vmatpush1.bf16.xpose.msra.mxu0 0
        %334 = vmatprep.subr.bf16.mxu0 0
        %335 = vmatpush1.bf16.xpose.msra.mxu0 0
        %336 = vmatprep.subr.bf16.mxu0 0
        %337 = vmatpush1.bf16.xpose.msra.mxu0 0
        %338 = vmatprep.subr.bf16.mxu0 0
        %339 = vmatpush1.bf16.xpose.msra.mxu0 0
        %340 = vmatprep.subr.bf16.mxu0 0
        %341 = vmatpush1.bf16.xpose.msra.mxu0 0
        %342 = vmatprep.subr.bf16.mxu0 0
        %343 = vmatpush1.bf16.xpose.msra.mxu0 0
        %344 = vmatprep.subr.bf16.mxu0 0
        %345 = vmatpush1.bf16.xpose.msra.mxu0 0
        %346 = vmatprep.subr.bf16.mxu0 0
        %347 = vmatpush1.bf16.xpose.msra.mxu0 0
        %348 = vmatprep.subr.bf16.mxu0 0
        %349 = vmatpush1.bf16.xpose.msra.mxu0 0
        %350 = vmatprep.subr.bf16.mxu0 0
        %351 = vmatpush1.bf16.xpose.msra.mxu0 0
        %352 = vmatprep.mubr.bf16.mxu0 0
        %353 = vmatmul.mubr.bf16.gmra.mrb[0].mxu0 %v315
        %v354 = vpop.f32.mrb[0].mxu0
        %v355 = vadd.f32 0.0, %v354
        %v356 = vpop.f32.mrb[0].mxu0
        %v357 = vpop.f32.mrb[0].mxu0
        %v358 = vpop.f32.mrb[0].mxu0
        %359 = vdwg.mxu0
        %v361 = vsel %vm313, %v290, 0
        %v364 = vsel %vm313, %v298, 0
        %366 = vmatprep.subr.bf16.mxu0 0
        %367 = vmatpush1.bf16.xpose.msra.mxu0 %v364
        %368 = vmatprep.subr.bf16.mxu0 0
        %369 = vmatpush1.bf16.xpose.msra.mxu0 0
        %370 = vmatprep.subr.bf16.mxu0 0
        %371 = vmatpush1.bf16.xpose.msra.mxu0 0
        %372 = vmatprep.subr.bf16.mxu0 0
        %373 = vmatpush1.bf16.xpose.msra.mxu0 0
        %374 = vmatprep.subr.bf16.mxu0 0
        %375 = vmatpush1.bf16.xpose.msra.mxu0 0
        %376 = vmatprep.subr.bf16.mxu0 0
        %377 = vmatpush1.bf16.xpose.msra.mxu0 0
        %378 = vmatprep.subr.bf16.mxu0 0
        %379 = vmatpush1.bf16.xpose.msra.mxu0 0
        %380 = vmatprep.subr.bf16.mxu0 0
        %381 = vmatpush1.bf16.xpose.msra.mxu0 0
        %382 = vmatprep.subr.bf16.mxu0 0
        %383 = vmatpush1.bf16.xpose.msra.mxu0 0
        %384 = vmatprep.subr.bf16.mxu0 0
        %385 = vmatpush1.bf16.xpose.msra.mxu0 0
        %386 = vmatprep.subr.bf16.mxu0 0
        %387 = vmatpush1.bf16.xpose.msra.mxu0 0
        %388 = vmatprep.subr.bf16.mxu0 0
        %389 = vmatpush1.bf16.xpose.msra.mxu0 0
        %390 = vmatprep.subr.bf16.mxu0 0
        %391 = vmatpush1.bf16.xpose.msra.mxu0 0
        %392 = vmatprep.subr.bf16.mxu0 0
        %393 = vmatpush1.bf16.xpose.msra.mxu0 0
        %394 = vmatprep.subr.bf16.mxu0 0
        %395 = vmatpush1.bf16.xpose.msra.mxu0 0
        %396 = vmatprep.subr.bf16.mxu0 0
        %397 = vmatpush1.bf16.xpose.msra.mxu0 0
        %398 = vmatprep.mubr.bf16.mxu0 0
        %399 = vmatmul.mubr.bf16.gmra.mrb[0].mxu0 %v361
        %v400 = vpop.f32.mrb[0].mxu0
        %v401 = vadd.f32 0.0, %v400
        %v402 = vpop.f32.mrb[0].mxu0
        %v403 = vpop.f32.mrb[0].mxu0
        %v404 = vpop.f32.mrb[0].mxu0
        %405 = vdwg.mxu0
        %v407 = vsel %vm313, %v291, 0
        %v410 = vsel %vm313, %v299, 0
        %412 = vmatprep.subr.bf16.mxu0 0
        %413 = vmatpush1.bf16.xpose.msra.mxu0 %v410
        %414 = vmatprep.subr.bf16.mxu0 0
        %415 = vmatpush1.bf16.xpose.msra.mxu0 0
        %416 = vmatprep.subr.bf16.mxu0 0
        %417 = vmatpush1.bf16.xpose.msra.mxu0 0
        %418 = vmatprep.subr.bf16.mxu0 0
        %419 = vmatpush1.bf16.xpose.msra.mxu0 0
        %420 = vmatprep.subr.bf16.mxu0 0
        %421 = vmatpush1.bf16.xpose.msra.mxu0 0
        %422 = vmatprep.subr.bf16.mxu0 0
        %423 = vmatpush1.bf16.xpose.msra.mxu0 0
        %424 = vmatprep.subr.bf16.mxu0 0
        %425 = vmatpush1.bf16.xpose.msra.mxu0 0
        %426 = vmatprep.subr.bf16.mxu0 0
        %427 = vmatpush1.bf16.xpose.msra.mxu0 0
        %428 = vmatprep.subr.bf16.mxu0 0
        %429 = vmatpush1.bf16.xpose.msra.mxu0 0
        %430 = vmatprep.subr.bf16.mxu0 0
        %431 = vmatpush1.bf16.xpose.msra.mxu0 0
        %432 = vmatprep.subr.bf16.mxu0 0
        %433 = vmatpush1.bf16.xpose.msra.mxu0 0
        %434 = vmatprep.subr.bf16.mxu0 0
        %435 = vmatpush1.bf16.xpose.msra.mxu0 0
        %436 = vmatprep.subr.bf16.mxu0 0
        %437 = vmatpush1.bf16.xpose.msra.mxu0 0
        %438 = vmatprep.subr.bf16.mxu0 0
        %439 = vmatpush1.bf16.xpose.msra.mxu0 0
        %440 = vmatprep.subr.bf16.mxu0 0
        %441 = vmatpush1.bf16.xpose.msra.mxu0 0
        %442 = vmatprep.subr.bf16.mxu0 0
        %443 = vmatpush1.bf16.xpose.msra.mxu0 0
        %444 = vmatprep.mubr.bf16.mxu0 0
        %445 = vmatmul.mubr.bf16.gmra.mrb[0].mxu0 %v407
        %v446 = vpop.f32.mrb[0].mxu0
        %v447 = vadd.f32 0.0, %v446
        %v448 = vpop.f32.mrb[0].mxu0
        %v449 = vpop.f32.mrb[0].mxu0
        %v450 = vpop.f32.mrb[0].mxu0
        %451 = vdwg.mxu0
        %v453 = vsel %vm313, %v292, 0
        %v456 = vsel %vm313, %v300, 0
        %458 = vmatprep.subr.bf16.mxu0 0
        %459 = vmatpush1.bf16.xpose.msra.mxu0 %v456
        %460 = vmatprep.subr.bf16.mxu0 0
        %461 = vmatpush1.bf16.xpose.msra.mxu0 0
        %462 = vmatprep.subr.bf16.mxu0 0
        %463 = vmatpush1.bf16.xpose.msra.mxu0 0
        %464 = vmatprep.subr.bf16.mxu0 0
        %465 = vmatpush1.bf16.xpose.msra.mxu0 0
        %466 = vmatprep.subr.bf16.mxu0 0
        %467 = vmatpush1.bf16.xpose.msra.mxu0 0
        %468 = vmatprep.subr.bf16.mxu0 0
        %469 = vmatpush1.bf16.xpose.msra.mxu0 0
        %470 = vmatprep.subr.bf16.mxu0 0
        %471 = vmatpush1.bf16.xpose.msra.mxu0 0
        %472 = vmatprep.subr.bf16.mxu0 0
        %473 = vmatpush1.bf16.xpose.msra.mxu0 0
        %474 = vmatprep.subr.bf16.mxu0 0
        %475 = vmatpush1.bf16.xpose.msra.mxu0 0
        %476 = vmatprep.subr.bf16.mxu0 0
        %477 = vmatpush1.bf16.xpose.msra.mxu0 0
        %478 = vmatprep.subr.bf16.mxu0 0
        %479 = vmatpush1.bf16.xpose.msra.mxu0 0
        %480 = vmatprep.subr.bf16.mxu0 0
        %481 = vmatpush1.bf16.xpose.msra.mxu0 0
        %482 = vmatprep.subr.bf16.mxu0 0
        %483 = vmatpush1.bf16.xpose.msra.mxu0 0
        %484 = vmatprep.subr.bf16.mxu0 0
        %485 = vmatpush1.bf16.xpose.msra.mxu0 0
        %486 = vmatprep.subr.bf16.mxu0 0
        %487 = vmatpush1.bf16.xpose.msra.mxu0 0
        %488 = vmatprep.subr.bf16.mxu0 0
        %489 = vmatpush1.bf16.xpose.msra.mxu0 0
        %490 = vmatprep.mubr.bf16.mxu0 0
        %491 = vmatmul.mubr.bf16.gmra.mrb[0].mxu0 %v453
        %v492 = vpop.f32.mrb[0].mxu0
        %v493 = vadd.f32 0.0, %v492
        %v494 = vpop.f32.mrb[0].mxu0
        %v495 = vpop.f32.mrb[0].mxu0
        %v496 = vpop.f32.mrb[0].mxu0
        %497 = vdwg.mxu0
        %v499 = vsel %vm313, %v293, 0
        %v502 = vsel %vm313, %v301, 0
        %504 = vmatprep.subr.bf16.mxu0 0
        %505 = vmatpush1.bf16.xpose.msra.mxu0 %v502
        %506 = vmatprep.subr.bf16.mxu0 0
        %507 = vmatpush1.bf16.xpose.msra.mxu0 0
        %508 = vmatprep.subr.bf16.mxu0 0
        %509 = vmatpush1.bf16.xpose.msra.mxu0 0
        %510 = vmatprep.subr.bf16.mxu0 0
        %511 = vmatpush1.bf16.xpose.msra.mxu0 0
        %512 = vmatprep.subr.bf16.mxu0 0
        %513 = vmatpush1.bf16.xpose.msra.mxu0 0
        %514 = vmatprep.subr.bf16.mxu0 0
        %515 = vmatpush1.bf16.xpose.msra.mxu0 0
        %516 = vmatprep.subr.bf16.mxu0 0
        %517 = vmatpush1.bf16.xpose.msra.mxu0 0
        %518 = vmatprep.subr.bf16.mxu0 0
        %519 = vmatpush1.bf16.xpose.msra.mxu0 0
        %520 = vmatprep.subr.bf16.mxu0 0
        %521 = vmatpush1.bf16.xpose.msra.mxu0 0
        %522 = vmatprep.subr.bf16.mxu0 0
        %523 = vmatpush1.bf16.xpose.msra.mxu0 0
        %524 = vmatprep.subr.bf16.mxu0 0
        %525 = vmatpush1.bf16.xpose.msra.mxu0 0
        %526 = vmatprep.subr.bf16.mxu0 0
        %527 = vmatpush1.bf16.xpose.msra.mxu0 0
        %528 = vmatprep.subr.bf16.mxu0 0
        %529 = vmatpush1.bf16.xpose.msra.mxu0 0
        %530 = vmatprep.subr.bf16.mxu0 0
        %531 = vmatpush1.bf16.xpose.msra.mxu0 0
        %532 = vmatprep.subr.bf16.mxu0 0
        %533 = vmatpush1.bf16.xpose.msra.mxu0 0
        %534 = vmatprep.subr.bf16.mxu0 0
        %535 = vmatpush1.bf16.xpose.msra.mxu0 0
        %536 = vmatprep.mubr.bf16.mxu0 0
        %537 = vmatmul.mubr.bf16.gmra.mrb[0].mxu0 %v499
        %v538 = vpop.f32.mrb[0].mxu0
        %v539 = vadd.f32 0.0, %v538
        %v540 = vpop.f32.mrb[0].mxu0
        %v541 = vpop.f32.mrb[0].mxu0
        %v542 = vpop.f32.mrb[0].mxu0
        %543 = vdwg.mxu0
        %v545 = vsel %vm313, %v294, 0
        %v548 = vsel %vm313, %v302, 0
        %550 = vmatprep.subr.bf16.mxu0 0
        %551 = vmatpush1.bf16.xpose.msra.mxu0 %v548
        %552 = vmatprep.subr.bf16.mxu0 0
        %553 = vmatpush1.bf16.xpose.msra.mxu0 0
        %554 = vmatprep.subr.bf16.mxu0 0
        %555 = vmatpush1.bf16.xpose.msra.mxu0 0
        %556 = vmatprep.subr.bf16.mxu0 0
        %557 = vmatpush1.bf16.xpose.msra.mxu0 0
        %558 = vmatprep.subr.bf16.mxu0 0
        %559 = vmatpush1.bf16.xpose.msra.mxu0 0
        %560 = vmatprep.subr.bf16.mxu0 0
        %561 = vmatpush1.bf16.xpose.msra.mxu0 0
        %562 = vmatprep.subr.bf16.mxu0 0
        %563 = vmatpush1.bf16.xpose.msra.mxu0 0
        %564 = vmatprep.subr.bf16.mxu0 0
        %565 = vmatpush1.bf16.xpose.msra.mxu0 0
        %566 = vmatprep.subr.bf16.mxu0 0
        %567 = vmatpush1.bf16.xpose.msra.mxu0 0
        %568 = vmatprep.subr.bf16.mxu0 0
        %569 = vmatpush1.bf16.xpose.msra.mxu0 0
        %570 = vmatprep.subr.bf16.mxu0 0
        %571 = vmatpush1.bf16.xpose.msra.mxu0 0
        %572 = vmatprep.subr.bf16.mxu0 0
        %573 = vmatpush1.bf16.xpose.msra.mxu0 0
        %574 = vmatprep.subr.bf16.mxu0 0
        %575 = vmatpush1.bf16.xpose.msra.mxu0 0
        %576 = vmatprep.subr.bf16.mxu0 0
        %577 = vmatpush1.bf16.xpose.msra.mxu0 0
        %578 = vmatprep.subr.bf16.mxu0 0
        %579 = vmatpush1.bf16.xpose.msra.mxu0 0
        %580 = vmatprep.subr.bf16.mxu0 0
        %581 = vmatpush1.bf16.xpose.msra.mxu0 0
        %582 = vmatprep.mubr.bf16.mxu0 0
        %583 = vmatmul.mubr.bf16.gmra.mrb[0].mxu0 %v545
        %v584 = vpop.f32.mrb[0].mxu0
        %v585 = vadd.f32 0.0, %v584
        %v586 = vpop.f32.mrb[0].mxu0
        %v587 = vpop.f32.mrb[0].mxu0
        %v588 = vpop.f32.mrb[0].mxu0
        %589 = vdwg.mxu0
        %v591 = vsel %vm313, %v295, 0
        %v594 = vsel %vm313, %v303, 0
        %596 = vmatprep.subr.bf16.mxu0 0
        %597 = vmatpush1.bf16.xpose.msra.mxu0 %v594
        %598 = vmatprep.subr.bf16.mxu0 0
        %599 = vmatpush1.bf16.xpose.msra.mxu0 0
        %600 = vmatprep.subr.bf16.mxu0 0
        %601 = vmatpush1.bf16.xpose.msra.mxu0 0
        %602 = vmatprep.subr.bf16.mxu0 0
        %603 = vmatpush1.bf16.xpose.msra.mxu0 0
        %604 = vmatprep.subr.bf16.mxu0 0
        %605 = vmatpush1.bf16.xpose.msra.mxu0 0
        %606 = vmatprep.subr.bf16.mxu0 0
        %607 = vmatpush1.bf16.xpose.msra.mxu0 0
        %608 = vmatprep.subr.bf16.mxu0 0
        %609 = vmatpush1.bf16.xpose.msra.mxu0 0
        %610 = vmatprep.subr.bf16.mxu0 0
        %611 = vmatpush1.bf16.xpose.msra.mxu0 0
        %612 = vmatprep.subr.bf16.mxu0 0
        %613 = vmatpush1.bf16.xpose.msra.mxu0 0
        %614 = vmatprep.subr.bf16.mxu0 0
        %615 = vmatpush1.bf16.xpose.msra.mxu0 0
        %616 = vmatprep.subr.bf16.mxu0 0
        %617 = vmatpush1.bf16.xpose.msra.mxu0 0
        %618 = vmatprep.subr.bf16.mxu0 0
        %619 = vmatpush1.bf16.xpose.msra.mxu0 0
        %620 = vmatprep.subr.bf16.mxu0 0
        %621 = vmatpush1.bf16.xpose.msra.mxu0 0
        %622 = vmatprep.subr.bf16.mxu0 0
        %623 = vmatpush1.bf16.xpose.msra.mxu0 0
        %624 = vmatprep.subr.bf16.mxu0 0
        %625 = vmatpush1.bf16.xpose.msra.mxu0 0
        %626 = vmatprep.subr.bf16.mxu0 0
        %627 = vmatpush1.bf16.xpose.msra.mxu0 0
        %628 = vmatprep.mubr.bf16.mxu0 0
        %629 = vmatmul.mubr.bf16.gmra.mrb[0].mxu0 %v591
        %v630 = vpop.f32.mrb[0].mxu0
        %v631 = vadd.f32 0.0, %v630
        %v632 = vpop.f32.mrb[0].mxu0
        %v633 = vpop.f32.mrb[0].mxu0
        %v634 = vpop.f32.mrb[0].mxu0
        %635 = vdwg.mxu0
        %v637 = vsel %vm313, %v296, 0
        %v640 = vsel %vm313, %v304, 0
        %642 = vmatprep.subr.bf16.mxu0 0
        %643 = vmatpush1.bf16.xpose.msra.mxu0 %v640
        %644 = vmatprep.subr.bf16.mxu0 0
        %645 = vmatpush1.bf16.xpose.msra.mxu0 0
        %646 = vmatprep.subr.bf16.mxu0 0
        %647 = vmatpush1.bf16.xpose.msra.mxu0 0
        %648 = vmatprep.subr.bf16.mxu0 0
        %649 = vmatpush1.bf16.xpose.msra.mxu0 0
        %650 = vmatprep.subr.bf16.mxu0 0
        %651 = vmatpush1.bf16.xpose.msra.mxu0 0
        %652 = vmatprep.subr.bf16.mxu0 0
        %653 = vmatpush1.bf16.xpose.msra.mxu0 0
        %654 = vmatprep.subr.bf16.mxu0 0
        %655 = vmatpush1.bf16.xpose.msra.mxu0 0
        %656 = vmatprep.subr.bf16.mxu0 0
        %657 = vmatpush1.bf16.xpose.msra.mxu0 0
        %658 = vmatprep.subr.bf16.mxu0 0
        %659 = vmatpush1.bf16.xpose.msra.mxu0 0
        %660 = vmatprep.subr.bf16.mxu0 0
        %661 = vmatpush1.bf16.xpose.msra.mxu0 0
        %662 = vmatprep.subr.bf16.mxu0 0
        %663 = vmatpush1.bf16.xpose.msra.mxu0 0
        %664 = vmatprep.subr.bf16.mxu0 0
        %665 = vmatpush1.bf16.xpose.msra.mxu0 0
        %666 = vmatprep.subr.bf16.mxu0 0
        %667 = vmatpush1.bf16.xpose.msra.mxu0 0
        %668 = vmatprep.subr.bf16.mxu0 0
        %669 = vmatpush1.bf16.xpose.msra.mxu0 0
        %670 = vmatprep.subr.bf16.mxu0 0
        %671 = vmatpush1.bf16.xpose.msra.mxu0 0
        %672 = vmatprep.subr.bf16.mxu0 0
        %673 = vmatpush1.bf16.xpose.msra.mxu0 0
        %674 = vmatprep.mubr.bf16.mxu0 0
        %675 = vmatmul.mubr.bf16.gmra.mrb[0].mxu0 %v637
        %v676 = vpop.f32.mrb[0].mxu0
        %v677 = vadd.f32 0.0, %v676
        %v678 = vpop.f32.mrb[0].mxu0
        %v679 = vpop.f32.mrb[0].mxu0
        %v680 = vpop.f32.mrb[0].mxu0
        %681 = vdwg.mxu0
        %vm682 = vcmask 64512
        %v683 = vsel %vm682, %v355, -inf
        %684 = vmax.xlane.f32.xlu0 %v683
        %v685 = vpop.xlane.xlu0 %684
        %v686 = vsel %vm682, %v401, -inf
        %687 = vmax.xlane.f32.xlu0 %v686
        %v688 = vpop.xlane.xlu0 %687
        %v689 = vsel %vm682, %v447, -inf
        %690 = vmax.xlane.f32.xlu0 %v689
        %v691 = vpop.xlane.xlu0 %690
        %v692 = vsel %vm682, %v493, -inf
        %693 = vmax.xlane.f32.xlu0 %v692
        %v694 = vpop.xlane.xlu0 %693
        %v695 = vsel %vm682, %v539, -inf
        %696 = vmax.xlane.f32.xlu0 %v695
        %v697 = vpop.xlane.xlu0 %696
        %v698 = vsel %vm682, %v585, -inf
        %699 = vmax.xlane.f32.xlu0 %v698
        %v700 = vpop.xlane.xlu0 %699
        %v701 = vsel %vm682, %v631, -inf
        %702 = vmax.xlane.f32.xlu0 %v701
        %v703 = vpop.xlane.xlu0 %702
        %v704 = vsel %vm682, %v677, -inf
        %705 = vmax.xlane.f32.xlu0 %v704
        %v706 = vpop.xlane.xlu0 %705
        %v707 = vsub.f32 %v355, %v685
        %v708 = vsub.f32 %v401, %v688
        %v709 = vsub.f32 %v447, %v691
        %v710 = vsub.f32 %v493, %v694
        %v711 = vsub.f32 %v539, %v697
        %v712 = vsub.f32 %v585, %v700
        %v713 = vsub.f32 %v631, %v703
        %v714 = vsub.f32 %v677, %v706
        %v715 = vmul.f32 %v707, 1.442695
        %v716 = vpow.pop %v715
        %v717 = vmul.f32 %v708, 1.442695
        %v718 = vpow.pop %v717
        %v719 = vmul.f32 %v709, 1.442695
        %v720 = vpow.pop %v719
        %v721 = vmul.f32 %v710, 1.442695
        %v722 = vpow.pop %v721
        %v723 = vmul.f32 %v711, 1.442695
        %v724 = vpow.pop %v723
        %v725 = vmul.f32 %v712, 1.442695
        %v726 = vpow.pop %v725
        %v727 = vmul.f32 %v713, 1.442695
        %v728 = vpow.pop %v727
        %v729 = vmul.f32 %v714, 1.442695
        %v730 = vpow.pop %v729
        %v731 = vsel %vm682, %v716, 0.0
        %732 = vadd.xlane.f32.xlu0 %v731
        %v733 = vpop.xlane.xlu0 %732
        %v734 = vsel %vm682, %v718, 0.0
        %735 = vadd.xlane.f32.xlu0 %v734
        %v736 = vpop.xlane.xlu0 %735
        %v737 = vsel %vm682, %v720, 0.0
        %738 = vadd.xlane.f32.xlu0 %v737
        %v739 = vpop.xlane.xlu0 %738
        %v740 = vsel %vm682, %v722, 0.0
        %741 = vadd.xlane.f32.xlu0 %v740
        %v742 = vpop.xlane.xlu0 %741
        %v743 = vsel %vm682, %v724, 0.0
        %744 = vadd.xlane.f32.xlu0 %v743
        %v745 = vpop.xlane.xlu0 %744
        %v746 = vsel %vm682, %v726, 0.0
        %747 = vadd.xlane.f32.xlu0 %v746
        %v748 = vpop.xlane.xlu0 %747
        %v749 = vsel %vm682, %v728, 0.0
        %750 = vadd.xlane.f32.xlu0 %v749
        %v751 = vpop.xlane.xlu0 %750
        %v752 = vsel %vm682, %v730, 0.0
        %753 = vadd.xlane.f32.xlu0 %v752
        %v754 = vpop.xlane.xlu0 %753
        %v755 = vrcp.pop %v733
        %v756 = vrcp.pop %v736
        %v757 = vrcp.pop %v739
        %v758 = vrcp.pop %v742
        %v759 = vrcp.pop %v745
        %v760 = vrcp.pop %v748
        %v761 = vrcp.pop %v751
        %v762 = vrcp.pop %v754
        %v763 = vmul.f32 %v716, %v755
        %v764 = vmul.f32 %v718, %v756
        %v765 = vmul.f32 %v720, %v757
        %v766 = vmul.f32 %v722, %v758
        %v767 = vmul.f32 %v724, %v759
        %v768 = vmul.f32 %v726, %v760
        %v769 = vmul.f32 %v728, %v761
        %v770 = vmul.f32 %v730, %v762
        %v771 = vpack.c.bf16 %v763, %v763
        %v772 = vpack.c.bf16 %v764, %v764
        %v773 = vpack.c.bf16 %v765, %v765
        %v774 = vpack.c.bf16 %v766, %v766
        %v775 = vpack.c.bf16 %v767, %v767
        %v776 = vpack.c.bf16 %v768, %v768
        %v777 = vpack.c.bf16 %v769, %v769
        %v778 = vpack.c.bf16 %v770, %v770
        %v780 = vsel %vm682, %v771, 0
        %vm782 = vcmask 1043456
        %v784 = vsel %vm782, %v305, 0
        %786 = vmatprep.subr.bf16.mxu0 0
        %787 = vmatpush1.bf16.msra.mxu0 %v784
        %788 = vmatprep.subr.bf16.mxu0 0
        %789 = vmatpush1.bf16.msra.mxu0 0
        %790 = vmatprep.subr.bf16.mxu0 0
        %791 = vmatpush1.bf16.msra.mxu0 0
        %792 = vmatprep.subr.bf16.mxu0 0
        %793 = vmatpush1.bf16.msra.mxu0 0
        %794 = vmatprep.subr.bf16.mxu0 0
        %795 = vmatpush1.bf16.msra.mxu0 0
        %796 = vmatprep.subr.bf16.mxu0 0
        %797 = vmatpush1.bf16.msra.mxu0 0
        %798 = vmatprep.subr.bf16.mxu0 0
        %799 = vmatpush1.bf16.msra.mxu0 0
        %800 = vmatprep.subr.bf16.mxu0 0
        %801 = vmatpush1.bf16.msra.mxu0 0
        %802 = vmatprep.subr.bf16.mxu0 0
        %803 = vmatpush1.bf16.msra.mxu0 0
        %804 = vmatprep.subr.bf16.mxu0 0
        %805 = vmatpush1.bf16.msra.mxu0 0
        %806 = vmatprep.subr.bf16.mxu0 0
        %807 = vmatpush1.bf16.msra.mxu0 0
        %808 = vmatprep.subr.bf16.mxu0 0
        %809 = vmatpush1.bf16.msra.mxu0 0
        %810 = vmatprep.subr.bf16.mxu0 0
        %811 = vmatpush1.bf16.msra.mxu0 0
        %812 = vmatprep.subr.bf16.mxu0 0
        %813 = vmatpush1.bf16.msra.mxu0 0
        %814 = vmatprep.subr.bf16.mxu0 0
        %815 = vmatpush1.bf16.msra.mxu0 0
        %816 = vmatprep.subr.bf16.mxu0 0
        %817 = vmatpush1.bf16.msra.mxu0 0
        %818 = vmatprep.mubr.bf16.mxu0 0
        %819 = vmatmul.mubr.bf16.gmra.mrb[0].mxu0 %v780
        %v820 = vpop.f32.mrb[0].mxu0
        %v821 = vadd.f32 0.0, %v820
        %v822 = vpop.f32.mrb[0].mxu0
        %v823 = vpop.f32.mrb[0].mxu0
        %v824 = vpop.f32.mrb[0].mxu0
        %825 = vdwg.mxu0
        %v827 = vsel %vm682, %v772, 0
        %v830 = vsel %vm782, %v306, 0
        %832 = vmatprep.subr.bf16.mxu0 0
        %833 = vmatpush1.bf16.msra.mxu0 %v830
        %834 = vmatprep.subr.bf16.mxu0 0
        %835 = vmatpush1.bf16.msra.mxu0 0
        %836 = vmatprep.subr.bf16.mxu0 0
        %837 = vmatpush1.bf16.msra.mxu0 0
        %838 = vmatprep.subr.bf16.mxu0 0
        %839 = vmatpush1.bf16.msra.mxu0 0
        %840 = vmatprep.subr.bf16.mxu0 0
        %841 = vmatpush1.bf16.msra.mxu0 0
        %842 = vmatprep.subr.bf16.mxu0 0
        %843 = vmatpush1.bf16.msra.mxu0 0
        %844 = vmatprep.subr.bf16.mxu0 0
        %845 = vmatpush1.bf16.msra.mxu0 0
        %846 = vmatprep.subr.bf16.mxu0 0
        %847 = vmatpush1.bf16.msra.mxu0 0
        %848 = vmatprep.subr.bf16.mxu0 0
        %849 = vmatpush1.bf16.msra.mxu0 0
        %850 = vmatprep.subr.bf16.mxu0 0
        %851 = vmatpush1.bf16.msra.mxu0 0
        %852 = vmatprep.subr.bf16.mxu0 0
        %853 = vmatpush1.bf16.msra.mxu0 0
        %854 = vmatprep.subr.bf16.mxu0 0
        %855 = vmatpush1.bf16.msra.mxu0 0
        %856 = vmatprep.subr.bf16.mxu0 0
        %857 = vmatpush1.bf16.msra.mxu0 0
        %858 = vmatprep.subr.bf16.mxu0 0
        %859 = vmatpush1.bf16.msra.mxu0 0
        %860 = vmatprep.subr.bf16.mxu0 0
        %861 = vmatpush1.bf16.msra.mxu0 0
        %862 = vmatprep.subr.bf16.mxu0 0
        %863 = vmatpush1.bf16.msra.mxu0 0
        %864 = vmatprep.mubr.bf16.mxu0 0
        %865 = vmatmul.mubr.bf16.gmra.mrb[0].mxu0 %v827
        %v866 = vpop.f32.mrb[0].mxu0
        %v867 = vadd.f32 0.0, %v866
        %v868 = vpop.f32.mrb[0].mxu0
        %v869 = vpop.f32.mrb[0].mxu0
        %v870 = vpop.f32.mrb[0].mxu0
        %871 = vdwg.mxu0
        %v873 = vsel %vm682, %v773, 0
        %v876 = vsel %vm782, %v307, 0
        %878 = vmatprep.subr.bf16.mxu0 0
        %879 = vmatpush1.bf16.msra.mxu0 %v876
        %880 = vmatprep.subr.bf16.mxu0 0
        %881 = vmatpush1.bf16.msra.mxu0 0
        %882 = vmatprep.subr.bf16.mxu0 0
        %883 = vmatpush1.bf16.msra.mxu0 0
        %884 = vmatprep.subr.bf16.mxu0 0
        %885 = vmatpush1.bf16.msra.mxu0 0
        %886 = vmatprep.subr.bf16.mxu0 0
        %887 = vmatpush1.bf16.msra.mxu0 0
        %888 = vmatprep.subr.bf16.mxu0 0
        %889 = vmatpush1.bf16.msra.mxu0 0
        %890 = vmatprep.subr.bf16.mxu0 0
        %891 = vmatpush1.bf16.msra.mxu0 0
        %892 = vmatprep.subr.bf16.mxu0 0
        %893 = vmatpush1.bf16.msra.mxu0 0
        %894 = vmatprep.subr.bf16.mxu0 0
        %895 = vmatpush1.bf16.msra.mxu0 0
        %896 = vmatprep.subr.bf16.mxu0 0
        %897 = vmatpush1.bf16.msra.mxu0 0
        %898 = vmatprep.subr.bf16.mxu0 0
        %899 = vmatpush1.bf16.msra.mxu0 0
        %900 = vmatprep.subr.bf16.mxu0 0
        %901 = vmatpush1.bf16.msra.mxu0 0
        %902 = vmatprep.subr.bf16.mxu0 0
        %903 = vmatpush1.bf16.msra.mxu0 0
        %904 = vmatprep.subr.bf16.mxu0 0
        %905 = vmatpush1.bf16.msra.mxu0 0
        %906 = vmatprep.subr.bf16.mxu0 0
        %907 = vmatpush1.bf16.msra.mxu0 0
        %908 = vmatprep.subr.bf16.mxu0 0
        %909 = vmatpush1.bf16.msra.mxu0 0
        %910 = vmatprep.mubr.bf16.mxu0 0
        %911 = vmatmul.mubr.bf16.gmra.mrb[0].mxu0 %v873
        %v912 = vpop.f32.mrb[0].mxu0
        %v913 = vadd.f32 0.0, %v912
        %v914 = vpop.f32.mrb[0].mxu0
        %v915 = vpop.f32.mrb[0].mxu0
        %v916 = vpop.f32.mrb[0].mxu0
        %917 = vdwg.mxu0
        %v919 = vsel %vm682, %v774, 0
        %v922 = vsel %vm782, %v308, 0
        %924 = vmatprep.subr.bf16.mxu0 0
        %925 = vmatpush1.bf16.msra.mxu0 %v922
        %926 = vmatprep.subr.bf16.mxu0 0
        %927 = vmatpush1.bf16.msra.mxu0 0
        %928 = vmatprep.subr.bf16.mxu0 0
        %929 = vmatpush1.bf16.msra.mxu0 0
        %930 = vmatprep.subr.bf16.mxu0 0
        %931 = vmatpush1.bf16.msra.mxu0 0
        %932 = vmatprep.subr.bf16.mxu0 0
        %933 = vmatpush1.bf16.msra.mxu0 0
        %934 = vmatprep.subr.bf16.mxu0 0
        %935 = vmatpush1.bf16.msra.mxu0 0
        %936 = vmatprep.subr.bf16.mxu0 0
        %937 = vmatpush1.bf16.msra.mxu0 0
        %938 = vmatprep.subr.bf16.mxu0 0
        %939 = vmatpush1.bf16.msra.mxu0 0
        %940 = vmatprep.subr.bf16.mxu0 0
        %941 = vmatpush1.bf16.msra.mxu0 0
        %942 = vmatprep.subr.bf16.mxu0 0
        %943 = vmatpush1.bf16.msra.mxu0 0
        %944 = vmatprep.subr.bf16.mxu0 0
        %945 = vmatpush1.bf16.msra.mxu0 0
        %946 = vmatprep.subr.bf16.mxu0 0
        %947 = vmatpush1.bf16.msra.mxu0 0
        %948 = vmatprep.subr.bf16.mxu0 0
        %949 = vmatpush1.bf16.msra.mxu0 0
        %950 = vmatprep.subr.bf16.mxu0 0
        %951 = vmatpush1.bf16.msra.mxu0 0
        %952 = vmatprep.subr.bf16.mxu0 0
        %953 = vmatpush1.bf16.msra.mxu0 0
        %954 = vmatprep.subr.bf16.mxu0 0
        %955 = vmatpush1.bf16.msra.mxu0 0
        %956 = vmatprep.mubr.bf16.mxu0 0
        %957 = vmatmul.mubr.bf16.gmra.mrb[0].mxu0 %v919
        %v958 = vpop.f32.mrb[0].mxu0
        %v959 = vadd.f32 0.0, %v958
        %v960 = vpop.f32.mrb[0].mxu0
        %v961 = vpop.f32.mrb[0].mxu0
        %v962 = vpop.f32.mrb[0].mxu0
        %963 = vdwg.mxu0
        %v965 = vsel %vm682, %v775, 0
        %v968 = vsel %vm782, %v309, 0
        %970 = vmatprep.subr.bf16.mxu0 0
        %971 = vmatpush1.bf16.msra.mxu0 %v968
        %972 = vmatprep.subr.bf16.mxu0 0
        %973 = vmatpush1.bf16.msra.mxu0 0
        %974 = vmatprep.subr.bf16.mxu0 0
        %975 = vmatpush1.bf16.msra.mxu0 0
        %976 = vmatprep.subr.bf16.mxu0 0
        %977 = vmatpush1.bf16.msra.mxu0 0
        %978 = vmatprep.subr.bf16.mxu0 0
        %979 = vmatpush1.bf16.msra.mxu0 0
        %980 = vmatprep.subr.bf16.mxu0 0
        %981 = vmatpush1.bf16.msra.mxu0 0
        %982 = vmatprep.subr.bf16.mxu0 0
        %983 = vmatpush1.bf16.msra.mxu0 0
        %984 = vmatprep.subr.bf16.mxu0 0
        %985 = vmatpush1.bf16.msra.mxu0 0
        %986 = vmatprep.subr.bf16.mxu0 0
        %987 = vmatpush1.bf16.msra.mxu0 0
        %988 = vmatprep.subr.bf16.mxu0 0
        %989 = vmatpush1.bf16.msra.mxu0 0
        %990 = vmatprep.subr.bf16.mxu0 0
        %991 = vmatpush1.bf16.msra.mxu0 0
        %992 = vmatprep.subr.bf16.mxu0 0
        %993 = vmatpush1.bf16.msra.mxu0 0
        %994 = vmatprep.subr.bf16.mxu0 0
        %995 = vmatpush1.bf16.msra.mxu0 0
        %996 = vmatprep.subr.bf16.mxu0 0
        %997 = vmatpush1.bf16.msra.mxu0 0
        %998 = vmatprep.subr.bf16.mxu0 0
        %999 = vmatpush1.bf16.msra.mxu0 0
        %1000 = vmatprep.subr.bf16.mxu0 0
        %1001 = vmatpush1.bf16.msra.mxu0 0
        %1002 = vmatprep.mubr.bf16.mxu0 0
        %1003 = vmatmul.mubr.bf16.gmra.mrb[0].mxu0 %v965
        %v1004 = vpop.f32.mrb[0].mxu0
        %v1005 = vadd.f32 0.0, %v1004
        %v1006 = vpop.f32.mrb[0].mxu0
        %v1007 = vpop.f32.mrb[0].mxu0
        %v1008 = vpop.f32.mrb[0].mxu0
        %1009 = vdwg.mxu0
        %v1011 = vsel %vm682, %v776, 0
        %v1014 = vsel %vm782, %v310, 0
        %1016 = vmatprep.subr.bf16.mxu0 0
        %1017 = vmatpush1.bf16.msra.mxu0 %v1014
        %1018 = vmatprep.subr.bf16.mxu0 0
        %1019 = vmatpush1.bf16.msra.mxu0 0
        %1020 = vmatprep.subr.bf16.mxu0 0
        %1021 = vmatpush1.bf16.msra.mxu0 0
        %1022 = vmatprep.subr.bf16.mxu0 0
        %1023 = vmatpush1.bf16.msra.mxu0 0
        %1024 = vmatprep.subr.bf16.mxu0 0
        %1025 = vmatpush1.bf16.msra.mxu0 0
        %1026 = vmatprep.subr.bf16.mxu0 0
        %1027 = vmatpush1.bf16.msra.mxu0 0
        %1028 = vmatprep.subr.bf16.mxu0 0
        %1029 = vmatpush1.bf16.msra.mxu0 0
        %1030 = vmatprep.subr.bf16.mxu0 0
        %1031 = vmatpush1.bf16.msra.mxu0 0
        %1032 = vmatprep.subr.bf16.mxu0 0
        %1033 = vmatpush1.bf16.msra.mxu0 0
        %1034 = vmatprep.subr.bf16.mxu0 0
        %1035 = vmatpush1.bf16.msra.mxu0 0
        %1036 = vmatprep.subr.bf16.mxu0 0
        %1037 = vmatpush1.bf16.msra.mxu0 0
        %1038 = vmatprep.subr.bf16.mxu0 0
        %1039 = vmatpush1.bf16.msra.mxu0 0
        %1040 = vmatprep.subr.bf16.mxu0 0
        %1041 = vmatpush1.bf16.msra.mxu0 0
        %1042 = vmatprep.subr.bf16.mxu0 0
        %1043 = vmatpush1.bf16.msra.mxu0 0
        %1044 = vmatprep.subr.bf16.mxu0 0
        %1045 = vmatpush1.bf16.msra.mxu0 0
        %1046 = vmatprep.subr.bf16.mxu0 0
        %1047 = vmatpush1.bf16.msra.mxu0 0
        %1048 = vmatprep.mubr.bf16.mxu0 0
        %1049 = vmatmul.mubr.bf16.gmra.mrb[0].mxu0 %v1011
        %v1050 = vpop.f32.mrb[0].mxu0
        %v1051 = vadd.f32 0.0, %v1050
        %v1052 = vpop.f32.mrb[0].mxu0
        %v1053 = vpop.f32.mrb[0].mxu0
        %v1054 = vpop.f32.mrb[0].mxu0
        %1055 = vdwg.mxu0
        %v1057 = vsel %vm682, %v777, 0
        %v1060 = vsel %vm782, %v311, 0
        %1062 = vmatprep.subr.bf16.mxu0 0
        %1063 = vmatpush1.bf16.msra.mxu0 %v1060
        %1064 = vmatprep.subr.bf16.mxu0 0
        %1065 = vmatpush1.bf16.msra.mxu0 0
        %1066 = vmatprep.subr.bf16.mxu0 0
        %1067 = vmatpush1.bf16.msra.mxu0 0
        %1068 = vmatprep.subr.bf16.mxu0 0
        %1069 = vmatpush1.bf16.msra.mxu0 0
        %1070 = vmatprep.subr.bf16.mxu0 0
        %1071 = vmatpush1.bf16.msra.mxu0 0
        %1072 = vmatprep.subr.bf16.mxu0 0
        %1073 = vmatpush1.bf16.msra.mxu0 0
        %1074 = vmatprep.subr.bf16.mxu0 0
        %1075 = vmatpush1.bf16.msra.mxu0 0
        %1076 = vmatprep.subr.bf16.mxu0 0
        %1077 = vmatpush1.bf16.msra.mxu0 0
        %1078 = vmatprep.subr.bf16.mxu0 0
        %1079 = vmatpush1.bf16.msra.mxu0 0
        %1080 = vmatprep.subr.bf16.mxu0 0
        %1081 = vmatpush1.bf16.msra.mxu0 0
        %1082 = vmatprep.subr.bf16.mxu0 0
        %1083 = vmatpush1.bf16.msra.mxu0 0
        %1084 = vmatprep.subr.bf16.mxu0 0
        %1085 = vmatpush1.bf16.msra.mxu0 0
        %1086 = vmatprep.subr.bf16.mxu0 0
        %1087 = vmatpush1.bf16.msra.mxu0 0
        %1088 = vmatprep.subr.bf16.mxu0 0
        %1089 = vmatpush1.bf16.msra.mxu0 0
        %1090 = vmatprep.subr.bf16.mxu0 0
        %1091 = vmatpush1.bf16.msra.mxu0 0
        %1092 = vmatprep.subr.bf16.mxu0 0
        %1093 = vmatpush1.bf16.msra.mxu0 0
        %1094 = vmatprep.mubr.bf16.mxu0 0
        %1095 = vmatmul.mubr.bf16.gmra.mrb[0].mxu0 %v1057
        %v1096 = vpop.f32.mrb[0].mxu0
        %v1097 = vadd.f32 0.0, %v1096
        %v1098 = vpop.f32.mrb[0].mxu0
        %v1099 = vpop.f32.mrb[0].mxu0
        %v1100 = vpop.f32.mrb[0].mxu0
        %1101 = vdwg.mxu0
        %v1103 = vsel %vm682, %v778, 0
        %v1106 = vsel %vm782, %v312, 0
        %1108 = vmatprep.subr.bf16.mxu0 0
        %1109 = vmatpush1.bf16.msra.mxu0 %v1106
        %1110 = vmatprep.subr.bf16.mxu0 0
        %1111 = vmatpush1.bf16.msra.mxu0 0
        %1112 = vmatprep.subr.bf16.mxu0 0
        %1113 = vmatpush1.bf16.msra.mxu0 0
        %1114 = vmatprep.subr.bf16.mxu0 0
        %1115 = vmatpush1.bf16.msra.mxu0 0
        %1116 = vmatprep.subr.bf16.mxu0 0
        %1117 = vmatpush1.bf16.msra.mxu0 0
        %1118 = vmatprep.subr.bf16.mxu0 0
        %1119 = vmatpush1.bf16.msra.mxu0 0
        %1120 = vmatprep.subr.bf16.mxu0 0
        %1121 = vmatpush1.bf16.msra.mxu0 0
        %1122 = vmatprep.subr.bf16.mxu0 0
        %1123 = vmatpush1.bf16.msra.mxu0 0
        %1124 = vmatprep.subr.bf16.mxu0 0
        %1125 = vmatpush1.bf16.msra.mxu0 0
        %1126 = vmatprep.subr.bf16.mxu0 0
        %1127 = vmatpush1.bf16.msra.mxu0 0
        %1128 = vmatprep.subr.bf16.mxu0 0
        %1129 = vmatpush1.bf16.msra.mxu0 0
        %1130 = vmatprep.subr.bf16.mxu0 0
        %1131 = vmatpush1.bf16.msra.mxu0 0
        %1132 = vmatprep.subr.bf16.mxu0 0
        %1133 = vmatpush1.bf16.msra.mxu0 0
        %1134 = vmatprep.subr.bf16.mxu0 0
        %1135 = vmatpush1.bf16.msra.mxu0 0
        %1136 = vmatprep.subr.bf16.mxu0 0
        %1137 = vmatpush1.bf16.msra.mxu0 0
        %1138 = vmatprep.subr.bf16.mxu0 0
        %1139 = vmatpush1.bf16.msra.mxu0 0
        %1140 = vmatprep.mubr.bf16.mxu0 0
        %1141 = vmatmul.mubr.bf16.gmra.mrb[0].mxu0 %v1103
        %v1142 = vpop.f32.mrb[0].mxu0
        %v1143 = vadd.f32 0.0, %v1142
        %v1144 = vpop.f32.mrb[0].mxu0
        %v1145 = vpop.f32.mrb[0].mxu0
        %v1146 = vpop.f32.mrb[0].mxu0
        %1147 = vdwg.mxu0
        %v1148 = vld [vmem:[%s3] sm:$0x3]
        %v1149 = vld [vmem:[%s3 + $0x2] sm:$0x3]
        %v1150 = vld [vmem:[%s3 + $0x4] sm:$0x3]
        %v1151 = vld [vmem:[%s3 + $0x6] sm:$0x3]
        %v1152 = vld [vmem:[%s3 + $0x8] sm:$0x3]
        %v1153 = vld [vmem:[%s3 + $0xa] sm:$0x3]
        %v1154 = vld [vmem:[%s3 + $0xc] sm:$0x3]
        %v1155 = vld [vmem:[%s3 + $0xe] sm:$0x3]
        %v1156 = vpack.c.bf16 %v821, %v821
        %v1157 = vpack.c.bf16 %v867, %v867
        %v1158 = vpack.c.bf16 %v913, %v913
        %v1159 = vpack.c.bf16 %v959, %v959
        %v1160 = vpack.c.bf16 %v1005, %v1005
        %v1161 = vpack.c.bf16 %v1051, %v1051
        %v1162 = vpack.c.bf16 %v1097, %v1097
        %v1163 = vpack.c.bf16 %v1143, %v1143
        %v1165 = vsel %vm313, %v1156, 0
        %vm1167 = vcmask 1041408
        %v1169 = vsel %vm1167, %v1148, 0
        %1171 = vmatprep.subr.bf16.mxu0 0
        %1172 = vmatpush1.bf16.msra.mxu0 %v1169
        %1173 = vmatprep.subr.bf16.mxu0 0
        %1174 = vmatpush1.bf16.msra.mxu0 0
        %1175 = vmatprep.subr.bf16.mxu0 0
        %1176 = vmatpush1.bf16.msra.mxu0 0
        %1177 = vmatprep.subr.bf16.mxu0 0
        %1178 = vmatpush1.bf16.msra.mxu0 0
        %1179 = vmatprep.subr.bf16.mxu0 0
        %1180 = vmatpush1.bf16.msra.mxu0 0
        %1181 = vmatprep.subr.bf16.mxu0 0
        %1182 = vmatpush1.bf16.msra.mxu0 0
        %1183 = vmatprep.subr.bf16.mxu0 0
        %1184 = vmatpush1.bf16.msra.mxu0 0
        %1185 = vmatprep.subr.bf16.mxu0 0
        %1186 = vmatpush1.bf16.msra.mxu0 0
        %1187 = vmatprep.subr.bf16.mxu0 0
        %1188 = vmatpush1.bf16.msra.mxu0 0
        %1189 = vmatprep.subr.bf16.mxu0 0
        %1190 = vmatpush1.bf16.msra.mxu0 0
        %1191 = vmatprep.subr.bf16.mxu0 0
        %1192 = vmatpush1.bf16.msra.mxu0 0
        %1193 = vmatprep.subr.bf16.mxu0 0
        %1194 = vmatpush1.bf16.msra.mxu0 0
        %1195 = vmatprep.subr.bf16.mxu0 0
        %1196 = vmatpush1.bf16.msra.mxu0 0
        %1197 = vmatprep.subr.bf16.mxu0 0
        %1198 = vmatpush1.bf16.msra.mxu0 0
        %1199 = vmatprep.subr.bf16.mxu0 0
        %1200 = vmatpush1.bf16.msra.mxu0 0
        %1201 = vmatprep.subr.bf16.mxu0 0
        %1202 = vmatpush1.bf16.msra.mxu0 0
        %1203 = vmatprep.mubr.bf16.mxu0 0
        %1204 = vmatmul.mubr.bf16.gmra.mrb[0].mxu0 %v1165
        %v1205 = vpop.f32.mrb[0].mxu0
        %v1206 = vadd.f32 0.0, %v1205
        %v1207 = vpop.f32.mrb[0].mxu0
        %v1208 = vpop.f32.mrb[0].mxu0
        %v1209 = vpop.f32.mrb[0].mxu0
        %1210 = vdwg.mxu0
        %v1212 = vsel %vm313, %v1157, 0
        %v1215 = vsel %vm1167, %v1149, 0
        %1217 = vmatprep.subr.bf16.mxu0 0
        %1218 = vmatpush1.bf16.msra.mxu0 %v1215
        %1219 = vmatprep.subr.bf16.mxu0 0
        %1220 = vmatpush1.bf16.msra.mxu0 0
        %1221 = vmatprep.subr.bf16.mxu0 0
        %1222 = vmatpush1.bf16.msra.mxu0 0
        %1223 = vmatprep.subr.bf16.mxu0 0
        %1224 = vmatpush1.bf16.msra.mxu0 0
        %1225 = vmatprep.subr.bf16.mxu0 0
        %1226 = vmatpush1.bf16.msra.mxu0 0
        %1227 = vmatprep.subr.bf16.mxu0 0
        %1228 = vmatpush1.bf16.msra.mxu0 0
        %1229 = vmatprep.subr.bf16.mxu0 0
        %1230 = vmatpush1.bf16.msra.mxu0 0
        %1231 = vmatprep.subr.bf16.mxu0 0
        %1232 = vmatpush1.bf16.msra.mxu0 0
        %1233 = vmatprep.subr.bf16.mxu0 0
        %1234 = vmatpush1.bf16.msra.mxu0 0
        %1235 = vmatprep.subr.bf16.mxu0 0
        %1236 = vmatpush1.bf16.msra.mxu0 0
        %1237 = vmatprep.subr.bf16.mxu0 0
        %1238 = vmatpush1.bf16.msra.mxu0 0
        %1239 = vmatprep.subr.bf16.mxu0 0
        %1240 = vmatpush1.bf16.msra.mxu0 0
        %1241 = vmatprep.subr.bf16.mxu0 0
        %1242 = vmatpush1.bf16.msra.mxu0 0
        %1243 = vmatprep.subr.bf16.mxu0 0
        %1244 = vmatpush1.bf16.msra.mxu0 0
        %1245 = vmatprep.subr.bf16.mxu0 0
        %1246 = vmatpush1.bf16.msra.mxu0 0
        %1247 = vmatprep.subr.bf16.mxu0 0
        %1248 = vmatpush1.bf16.msra.mxu0 0
        %1249 = vmatprep.mubr.bf16.mxu0 0
        %1250 = vmatmul.mubr.bf16.gmra.mrb[0].mxu0 %v1212
        %v1251 = vpop.f32.mrb[0].mxu0
        %v1252 = vadd.f32 0.0, %v1251
        %v1253 = vpop.f32.mrb[0].mxu0
        %v1254 = vpop.f32.mrb[0].mxu0
        %v1255 = vpop.f32.mrb[0].mxu0
        %1256 = vdwg.mxu0
        %v1258 = vsel %vm313, %v1158, 0
        %v1261 = vsel %vm1167, %v1150, 0
        %1263 = vmatprep.subr.bf16.mxu0 0
        %1264 = vmatpush1.bf16.msra.mxu0 %v1261
        %1265 = vmatprep.subr.bf16.mxu0 0
        %1266 = vmatpush1.bf16.msra.mxu0 0
        %1267 = vmatprep.subr.bf16.mxu0 0
        %1268 = vmatpush1.bf16.msra.mxu0 0
        %1269 = vmatprep.subr.bf16.mxu0 0
        %1270 = vmatpush1.bf16.msra.mxu0 0
        %1271 = vmatprep.subr.bf16.mxu0 0
        %1272 = vmatpush1.bf16.msra.mxu0 0
        %1273 = vmatprep.subr.bf16.mxu0 0
        %1274 = vmatpush1.bf16.msra.mxu0 0
        %1275 = vmatprep.subr.bf16.mxu0 0
        %1276 = vmatpush1.bf16.msra.mxu0 0
        %1277 = vmatprep.subr.bf16.mxu0 0
        %1278 = vmatpush1.bf16.msra.mxu0 0
        %1279 = vmatprep.subr.bf16.mxu0 0
        %1280 = vmatpush1.bf16.msra.mxu0 0
        %1281 = vmatprep.subr.bf16.mxu0 0
        %1282 = vmatpush1.bf16.msra.mxu0 0
        %1283 = vmatprep.subr.bf16.mxu0 0
        %1284 = vmatpush1.bf16.msra.mxu0 0
        %1285 = vmatprep.subr.bf16.mxu0 0
        %1286 = vmatpush1.bf16.msra.mxu0 0
        %1287 = vmatprep.subr.bf16.mxu0 0
        %1288 = vmatpush1.bf16.msra.mxu0 0
        %1289 = vmatprep.subr.bf16.mxu0 0
        %1290 = vmatpush1.bf16.msra.mxu0 0
        %1291 = vmatprep.subr.bf16.mxu0 0
        %1292 = vmatpush1.bf16.msra.mxu0 0
        %1293 = vmatprep.subr.bf16.mxu0 0
        %1294 = vmatpush1.bf16.msra.mxu0 0
        %1295 = vmatprep.mubr.bf16.mxu0 0
        %1296 = vmatmul.mubr.bf16.gmra.mrb[0].mxu0 %v1258
        %v1297 = vpop.f32.mrb[0].mxu0
        %v1298 = vadd.f32 0.0, %v1297
        %v1299 = vpop.f32.mrb[0].mxu0
        %v1300 = vpop.f32.mrb[0].mxu0
        %v1301 = vpop.f32.mrb[0].mxu0
        %1302 = vdwg.mxu0
        %v1304 = vsel %vm313, %v1159, 0
        %v1307 = vsel %vm1167, %v1151, 0
        %1309 = vmatprep.subr.bf16.mxu0 0
        %1310 = vmatpush1.bf16.msra.mxu0 %v1307
        %1311 = vmatprep.subr.bf16.mxu0 0
        %1312 = vmatpush1.bf16.msra.mxu0 0
        %1313 = vmatprep.subr.bf16.mxu0 0
        %1314 = vmatpush1.bf16.msra.mxu0 0
        %1315 = vmatprep.subr.bf16.mxu0 0
        %1316 = vmatpush1.bf16.msra.mxu0 0
        %1317 = vmatprep.subr.bf16.mxu0 0
        %1318 = vmatpush1.bf16.msra.mxu0 0
        %1319 = vmatprep.subr.bf16.mxu0 0
        %1320 = vmatpush1.bf16.msra.mxu0 0
        %1321 = vmatprep.subr.bf16.mxu0 0
        %1322 = vmatpush1.bf16.msra.mxu0 0
        %1323 = vmatprep.subr.bf16.mxu0 0
        %1324 = vmatpush1.bf16.msra.mxu0 0
        %1325 = vmatprep.subr.bf16.mxu0 0
        %1326 = vmatpush1.bf16.msra.mxu0 0
        %1327 = vmatprep.subr.bf16.mxu0 0
        %1328 = vmatpush1.bf16.msra.mxu0 0
        %1329 = vmatprep.subr.bf16.mxu0 0
        %1330 = vmatpush1.bf16.msra.mxu0 0
        %1331 = vmatprep.subr.bf16.mxu0 0
        %1332 = vmatpush1.bf16.msra.mxu0 0
        %1333 = vmatprep.subr.bf16.mxu0 0
        %1334 = vmatpush1.bf16.msra.mxu0 0
        %1335 = vmatprep.subr.bf16.mxu0 0
        %1336 = vmatpush1.bf16.msra.mxu0 0
        %1337 = vmatprep.subr.bf16.mxu0 0
        %1338 = vmatpush1.bf16.msra.mxu0 0
        %1339 = vmatprep.subr.bf16.mxu0 0
        %1340 = vmatpush1.bf16.msra.mxu0 0
        %1341 = vmatprep.mubr.bf16.mxu0 0
        %1342 = vmatmul.mubr.bf16.gmra.mrb[0].mxu0 %v1304
        %v1343 = vpop.f32.mrb[0].mxu0
        %v1344 = vadd.f32 0.0, %v1343
        %v1345 = vpop.f32.mrb[0].mxu0
        %v1346 = vpop.f32.mrb[0].mxu0
        %v1347 = vpop.f32.mrb[0].mxu0
        %1348 = vdwg.mxu0
        %v1350 = vsel %vm313, %v1160, 0
        %v1353 = vsel %vm1167, %v1152, 0
        %1355 = vmatprep.subr.bf16.mxu0 0
        %1356 = vmatpush1.bf16.msra.mxu0 %v1353
        %1357 = vmatprep.subr.bf16.mxu0 0
        %1358 = vmatpush1.bf16.msra.mxu0 0
        %1359 = vmatprep.subr.bf16.mxu0 0
        %1360 = vmatpush1.bf16.msra.mxu0 0
        %1361 = vmatprep.subr.bf16.mxu0 0
        %1362 = vmatpush1.bf16.msra.mxu0 0
        %1363 = vmatprep.subr.bf16.mxu0 0
        %1364 = vmatpush1.bf16.msra.mxu0 0
        %1365 = vmatprep.subr.bf16.mxu0 0
        %1366 = vmatpush1.bf16.msra.mxu0 0
        %1367 = vmatprep.subr.bf16.mxu0 0
        %1368 = vmatpush1.bf16.msra.mxu0 0
        %1369 = vmatprep.subr.bf16.mxu0 0
        %1370 = vmatpush1.bf16.msra.mxu0 0
        %1371 = vmatprep.subr.bf16.mxu0 0
        %1372 = vmatpush1.bf16.msra.mxu0 0
        %1373 = vmatprep.subr.bf16.mxu0 0
        %1374 = vmatpush1.bf16.msra.mxu0 0
        %1375 = vmatprep.subr.bf16.mxu0 0
        %1376 = vmatpush1.bf16.msra.mxu0 0
        %1377 = vmatprep.subr.bf16.mxu0 0
        %1378 = vmatpush1.bf16.msra.mxu0 0
        %1379 = vmatprep.subr.bf16.mxu0 0
        %1380 = vmatpush1.bf16.msra.mxu0 0
        %1381 = vmatprep.subr.bf16.mxu0 0
        %1382 = vmatpush1.bf16.msra.mxu0 0
        %1383 = vmatprep.subr.bf16.mxu0 0
        %1384 = vmatpush1.bf16.msra.mxu0 0
        %1385 = vmatprep.subr.bf16.mxu0 0
        %1386 = vmatpush1.bf16.msra.mxu0 0
        %1387 = vmatprep.mubr.bf16.mxu0 0
        %1388 = vmatmul.mubr.bf16.gmra.mrb[0].mxu0 %v1350
        %v1389 = vpop.f32.mrb[0].mxu0
        %v1390 = vadd.f32 0.0, %v1389
        %v1391 = vpop.f32.mrb[0].mxu0
        %v1392 = vpop.f32.mrb[0].mxu0
        %v1393 = vpop.f32.mrb[0].mxu0
        %1394 = vdwg.mxu0
        %v1396 = vsel %vm313, %v1161, 0
        %v1399 = vsel %vm1167, %v1153, 0
        %1401 = vmatprep.subr.bf16.mxu0 0
        %1402 = vmatpush1.bf16.msra.mxu0 %v1399
        %1403 = vmatprep.subr.bf16.mxu0 0
        %1404 = vmatpush1.bf16.msra.mxu0 0
        %1405 = vmatprep.subr.bf16.mxu0 0
        %1406 = vmatpush1.bf16.msra.mxu0 0
        %1407 = vmatprep.subr.bf16.mxu0 0
        %1408 = vmatpush1.bf16.msra.mxu0 0
        %1409 = vmatprep.subr.bf16.mxu0 0
        %1410 = vmatpush1.bf16.msra.mxu0 0
        %1411 = vmatprep.subr.bf16.mxu0 0
        %1412 = vmatpush1.bf16.msra.mxu0 0
        %1413 = vmatprep.subr.bf16.mxu0 0
        %1414 = vmatpush1.bf16.msra.mxu0 0
        %1415 = vmatprep.subr.bf16.mxu0 0
        %1416 = vmatpush1.bf16.msra.mxu0 0
        %1417 = vmatprep.subr.bf16.mxu0 0
        %1418 = vmatpush1.bf16.msra.mxu0 0
        %1419 = vmatprep.subr.bf16.mxu0 0
        %1420 = vmatpush1.bf16.msra.mxu0 0
        %1421 = vmatprep.subr.bf16.mxu0 0
        %1422 = vmatpush1.bf16.msra.mxu0 0
        %1423 = vmatprep.subr.bf16.mxu0 0
        %1424 = vmatpush1.bf16.msra.mxu0 0
        %1425 = vmatprep.subr.bf16.mxu0 0
        %1426 = vmatpush1.bf16.msra.mxu0 0
        %1427 = vmatprep.subr.bf16.mxu0 0
        %1428 = vmatpush1.bf16.msra.mxu0 0
        %1429 = vmatprep.subr.bf16.mxu0 0
        %1430 = vmatpush1.bf16.msra.mxu0 0
        %1431 = vmatprep.subr.bf16.mxu0 0
        %1432 = vmatpush1.bf16.msra.mxu0 0
        %1433 = vmatprep.mubr.bf16.mxu0 0
        %1434 = vmatmul.mubr.bf16.gmra.mrb[0].mxu0 %v1396
        %v1435 = vpop.f32.mrb[0].mxu0
        %v1436 = vadd.f32 0.0, %v1435
        %v1437 = vpop.f32.mrb[0].mxu0
        %v1438 = vpop.f32.mrb[0].mxu0
        %v1439 = vpop.f32.mrb[0].mxu0
        %1440 = vdwg.mxu0
        %v1442 = vsel %vm313, %v1162, 0
        %v1445 = vsel %vm1167, %v1154, 0
        %1447 = vmatprep.subr.bf16.mxu0 0
        %1448 = vmatpush1.bf16.msra.mxu0 %v1445
        %1449 = vmatprep.subr.bf16.mxu0 0
        %1450 = vmatpush1.bf16.msra.mxu0 0
        %1451 = vmatprep.subr.bf16.mxu0 0
        %1452 = vmatpush1.bf16.msra.mxu0 0
        %1453 = vmatprep.subr.bf16.mxu0 0
        %1454 = vmatpush1.bf16.msra.mxu0 0
        %1455 = vmatprep.subr.bf16.mxu0 0
        %1456 = vmatpush1.bf16.msra.mxu0 0
        %1457 = vmatprep.subr.bf16.mxu0 0
        %1458 = vmatpush1.bf16.msra.mxu0 0
        %1459 = vmatprep.subr.bf16.mxu0 0
        %1460 = vmatpush1.bf16.msra.mxu0 0
        %1461 = vmatprep.subr.bf16.mxu0 0
        %1462 = vmatpush1.bf16.msra.mxu0 0
        %1463 = vmatprep.subr.bf16.mxu0 0
        %1464 = vmatpush1.bf16.msra.mxu0 0
        %1465 = vmatprep.subr.bf16.mxu0 0
        %1466 = vmatpush1.bf16.msra.mxu0 0
        %1467 = vmatprep.subr.bf16.mxu0 0
        %1468 = vmatpush1.bf16.msra.mxu0 0
        %1469 = vmatprep.subr.bf16.mxu0 0
        %1470 = vmatpush1.bf16.msra.mxu0 0
        %1471 = vmatprep.subr.bf16.mxu0 0
        %1472 = vmatpush1.bf16.msra.mxu0 0
        %1473 = vmatprep.subr.bf16.mxu0 0
        %1474 = vmatpush1.bf16.msra.mxu0 0
        %1475 = vmatprep.subr.bf16.mxu0 0
        %1476 = vmatpush1.bf16.msra.mxu0 0
        %1477 = vmatprep.subr.bf16.mxu0 0
        %1478 = vmatpush1.bf16.msra.mxu0 0
        %1479 = vmatprep.mubr.bf16.mxu0 0
        %1480 = vmatmul.mubr.bf16.gmra.mrb[0].mxu0 %v1442
        %v1481 = vpop.f32.mrb[0].mxu0
        %v1482 = vadd.f32 0.0, %v1481
        %v1483 = vpop.f32.mrb[0].mxu0
        %v1484 = vpop.f32.mrb[0].mxu0
        %v1485 = vpop.f32.mrb[0].mxu0
        %1486 = vdwg.mxu0
        %v1488 = vsel %vm313, %v1163, 0
        %v1491 = vsel %vm1167, %v1155, 0
        %1493 = vmatprep.subr.bf16.mxu0 0
        %1494 = vmatpush1.bf16.msra.mxu0 %v1491
        %1495 = vmatprep.subr.bf16.mxu0 0
        %1496 = vmatpush1.bf16.msra.mxu0 0
        %1497 = vmatprep.subr.bf16.mxu0 0
        %1498 = vmatpush1.bf16.msra.mxu0 0
        %1499 = vmatprep.subr.bf16.mxu0 0
        %1500 = vmatpush1.bf16.msra.mxu0 0
        %1501 = vmatprep.subr.bf16.mxu0 0
        %1502 = vmatpush1.bf16.msra.mxu0 0
        %1503 = vmatprep.subr.bf16.mxu0 0
        %1504 = vmatpush1.bf16.msra.mxu0 0
        %1505 = vmatprep.subr.bf16.mxu0 0
        %1506 = vmatpush1.bf16.msra.mxu0 0
        %1507 = vmatprep.subr.bf16.mxu0 0
        %1508 = vmatpush1.bf16.msra.mxu0 0
        %1509 = vmatprep.subr.bf16.mxu0 0
        %1510 = vmatpush1.bf16.msra.mxu0 0
        %1511 = vmatprep.subr.bf16.mxu0 0
        %1512 = vmatpush1.bf16.msra.mxu0 0
        %1513 = vmatprep.subr.bf16.mxu0 0
        %1514 = vmatpush1.bf16.msra.mxu0 0
        %1515 = vmatprep.subr.bf16.mxu0 0
        %1516 = vmatpush1.bf16.msra.mxu0 0
        %1517 = vmatprep.subr.bf16.mxu0 0
        %1518 = vmatpush1.bf16.msra.mxu0 0
        %1519 = vmatprep.subr.bf16.mxu0 0
        %1520 = vmatpush1.bf16.msra.mxu0 0
        %1521 = vmatprep.subr.bf16.mxu0 0
        %1522 = vmatpush1.bf16.msra.mxu0 0
        %1523 = vmatprep.subr.bf16.mxu0 0
        %1524 = vmatpush1.bf16.msra.mxu0 0
        %1525 = vmatprep.mubr.bf16.mxu0 0
        %1526 = vmatmul.mubr.bf16.gmra.mrb[0].mxu0 %v1488
        %v1527 = vpop.f32.mrb[0].mxu0
        %v1528 = vadd.f32 0.0, %v1527
        %v1529 = vpop.f32.mrb[0].mxu0
        %v1530 = vpop.f32.mrb[0].mxu0
        %v1531 = vpop.f32.mrb[0].mxu0
        %1532 = vdwg.mxu0
        %vm1533 = vcmask 261120
        %v1534 = vsel %vm1533, %v1206, 0.0
        %v1535 = vsel %vm1533, %v1252, 0.0
        %v1536 = vadd.f32 %v1534, %v1535
        %v1537 = vsel %vm1533, %v1298, 0.0
        %v1538 = vadd.f32 %v1536, %v1537
        %v1539 = vsel %vm1533, %v1344, 0.0
        %v1540 = vadd.f32 %v1538, %v1539
        %v1541 = vsel %vm1533, %v1390, 0.0
        %v1542 = vadd.f32 %v1540, %v1541
        %v1543 = vsel %vm1533, %v1436, 0.0
        %v1544 = vadd.f32 %v1542, %v1543
        %v1545 = vsel %vm1533, %v1482, 0.0
        %v1546 = vadd.f32 %v1544, %v1545
        %v1547 = vsel %vm1533, %v1528, 0.0
        %v1548 = vadd.f32 %v1546, %v1547
        %v1549 = vld [vmem:[%s4] sm:$0x1]
        %v1551 = vlaneseq
        %v1552 = vshrl.u32 %v1551, 7
        %v1553 = vsub.s32 0, %v1552
        %v1554 = vrot.slane %v1549, %v1553
        %v1556 = vadd.f32 %v1548, %v1554
        %1557 = vst.msk [vmem:[%s269] sm:$0xff] %vm1533, %v1556
        %s1558 = sand.u32 %s163, 1
        %s1559 = scalar_lea.sflag [#allocation3], %s1558
        %s1560 = sand.u32 %s163, 1
        %s1561 = smul.addr %s1560, 8
        %s1562 = scalar_lea.vmem [#allocation2], %s1561
        // Predicated region
        $region41: #{attention_forward.3} parent=39 // pred_check
          %p1563 = pneg %p173
        $region42: #{attention_forward.3} parent=39 // pred_check_branch
          %1565 = sbr.rel (%p1563) target = $region44
        $region43: #{attention_forward.3} parent=39 // pred_region
          %s1567 = ssub.s32 128, 128
          %1568 = vsyncadd %s1559, %s1567
          %s1569 = sadd.s32 %s24, %s23
          %s1570 = smul.addr %s1569, 128
          %s1571 = scalar_lea.hbm %s5, %s1570
          %s1573 = sshll.u32 %s1562, 4
          %s1574 = int_to_ptr.vmem [resolvable:$true] %s1573
          %1576 = dma.vmem_to_hbm [thread:$0]  %s1574, 128, %s1571, %s1559
        $region44: #{attention_forward.3} parent=39 // pred_fallthru
          _
      $region40: #{attention_forward.3} parent=5 // pred_fallthru
        _
      %p1577 = scmp.le.s32.totalorder 2, %s14
      // Predicated region
      $region45: #{attention_forward.3} parent=5 // pred_check
        %p1578 = pneg %p1577
      $region46: #{attention_forward.3} parent=5 // pred_check_branch
        %1580 = sbr.rel (%p1578) target = $region48
      $region47: #{attention_forward.3} parent=5 // pred_region
        %s1581 = ssub.s32 %s14, 2
        // Predicated region
        $region49: #{attention_forward.3} parent=47 // pred_check
          %p1582 = pneg %p179
        $region50: #{attention_forward.3} parent=47 // pred_check_branch
          %1584 = sbr.rel (%p1582) target = $region52
        $region51: #{attention_forward.3} parent=47 // pred_region
          %s1585 = sand.u32 %s164, 1
          %s1586 = scalar_lea.sflag [#allocation3], %s1585
          %s1587 = sand.u32 %s164, 1
          %s1588 = smul.addr %s1587, 8
          %s1589 = scalar_lea.vmem [#allocation2], %s1588
          %1590 = dma.done %s1586, 128
        $region52: #{attention_forward.3} parent=47 // pred_fallthru
          _
      $region48: #{attention_forward.3} parent=5 // pred_fallthru
        _
    $region6: #{attention_forward.3} parent=1 // loop_footer
      %s18 = sadd.s32 1, %s14
    $region7: #{attention_forward.3} parent=1 // loop_footer_branch
      %13 = sbr.rel target = $region3
    $region8: #{attention_forward.3} parent=1 // loop_exit
      _
    %1591 = vsyncpa [#allocation3], 1
    %s1592 = scalar_lea.sflag [#allocation3], 1
    %1593 = vsyncpa %s1592, 1

</llo_original>
